<compile_context>
chip_gen: v5e
topology: v5e:2x2
jax: 0.10.0
libtpu: 0.0.40
codegen_flags: <defaults>
</compile_context>

<pallas_src>
import functools

import jax
import jax.numpy as jnp
from jax.experimental import pallas as pl
from jax.experimental.pallas import tpu as pltpu

_EPS = 1e-5  # div_eps in GraphInstanceNorm


def _fused_all_layers_kernel(*refs, n_layers, residual_flags, out_layer_ids):
    # refs layout: g, x, mask, W_0..W_{L-1}, b_0..b_{L-1}, out_0..out_{K-1}
    # g_ref: (TB, GS, N, N) bf16     adjacency channels for this batch tile
    # x_ref: (TB, N, C0)    f32      node features
    # m_ref: (TB, N, 1)     f32      vertex mask
    # W_l:   (GS, C_l, P_l) bf16     per-channel Linear weights (VMEM resident)
    # b_l:   (GS, P_l)      f32      per-channel biases         (VMEM resident)
    # out_k: (TB, N, P)     f32      normalized output features
    f32, bf16 = jnp.float32, jnp.bfloat16
    g_ref, x_ref, m_ref = refs[:3]
    w_refs = refs[3:3 + n_layers]
    b_refs = refs[3 + n_layers:3 + 2 * n_layers]
    o_refs = refs[3 + 2 * n_layers:]
    out_slot = {li: k for k, li in enumerate(out_layer_ids)}

    tb, gs, n, _ = g_ref.shape

    # G stays bf16 for the MXU; collapse (GS, N) into one M axis (layout no-op for N % 8 == 0).
    g2 = g_ref[...].reshape(tb, gs * n, n)                               # (TB, GS*N, N) bf16
    # Row sums of G, used to fold the Linear bias through the propagation:
    #   G @ (xW + 1 b^T) = (G @ x) W + (G @ 1) b^T.
    # (Transient f32 view of G exists only for this one-time reduce, not for the matmuls.)
    rowsum = jnp.sum(g2.astype(f32), axis=-1, keepdims=True)             # (TB, GS*N, 1)

    # Mask statistics are layer-invariant: compute once.
    m = m_ref[...].astype(f32) + _EPS                                    # (TB, N, 1)
    vc = jnp.sum(m, axis=1, keepdims=True)                               # (TB, 1, 1)
    inv_vc = pl.reciprocal(vc + _EPS, approx=True)                       # EUP, off the VPU path

    x = x_ref[...].astype(f32)                                           # (TB, N, C0)

    for li in range(n_layers):                                           # static unroll
        w = w_refs[li][...]                                              # (GS, C, P) bf16
        bias = b_refs[li][...]                                           # (GS, P)    f32
        c, p = w.shape[1], w.shape[2]

        # Graph propagation first: one batched bf16 MXU contraction, M = GS*N, f32 accumulate.
        h = jnp.einsum("bkm,bmc->bkc", g2, x.astype(bf16),
                       preferred_element_type=f32)                       # (TB, GS*N, C)
        hb = h.astype(bf16)

        acc = None
        for s in range(gs):                                              # GS small -> unrolled
            hs = hb[:, s * n:(s + 1) * n, :].reshape(tb * n, c)          # sublane-aligned slice
            z = jnp.dot(hs, w[s], preferred_element_type=f32).reshape(tb, n, p)
            z = z + rowsum[:, s * n:(s + 1) * n, :] * bias[s].reshape(1, 1, p)
            z = jnp.maximum(z, 0.0)                                      # nonlinearity
            acc = z if acc is None else jnp.maximum(acc, z)              # 'goodmax' over GS

        if residual_flags[li]:                                           # resnet=True and C == P
            acc = acc + x

        # GraphInstanceNorm: masked instance norm over the vertex axis (axis=1).
        xm = acc * m
        mean = jnp.sum(xm, axis=1, keepdims=True) * inv_vc
        xmm = (xm - mean) * m
        var = jnp.sum(xmm * xmm, axis=1, keepdims=True) * inv_vc
        x = xmm * jax.lax.rsqrt(var + _EPS)

        if li in out_slot:
            o = o_refs[out_slot[li]]
            o[...] = x.astype(o.dtype)


def _vmem_estimate_bytes(tb, gs, n, dims):
    cmax = max(dims)
    est = 2 * tb * gs * n * n * 2                 # G tile (bf16), double-buffered
    est += 2 * tb * n * dims[0] * 4               # x tile
    est += 2 * tb * n * 4                         # mask tile
    est += 2 * tb * n * max(dims[1:]) * 4         # out tile
    for c, p in zip(dims[:-1], dims[1:]):
        est += 2 * gs * (c * p * 2 + p * 4)       # resident W (bf16) + b (f32)
    est += tb * gs * n * cmax * 6                 # h (f32 + bf16 copy)
    est += 8 * tb * n * cmax * 4                  # x / acc / z / xm / xmm temporaries
    return est


def _pick_batch_tile(B, gs, n, dims, vmem_budget=40 << 20):
    """Largest divisor of B keeping grid >= 2 (v7x: 2 TCs) and fitting the VMEM budget."""
    best = 1
    for tb in range(1, B + 1):
        if B % tb:
            continue
        if B >= 2 and B // tb < 2:
            continue                              # keep >= 2 grid steps for v7x's 2 TensorCores
        if _vmem_estimate_bytes(tb, gs, n, dims) > vmem_budget:
            continue
        best = max(best, tb)
        if tb * n >= 1024:                        # MXU M dimension is already well filled
            break
    return best


def graph_mat_layers_instance_norm(G, x, input_mask, weights, biases, *,
                                   resnet=False, return_every_n=0,
                                   batch_tile=None, vmem_limit_bytes=None):
    """GraphMatLayersInstanceNorm.forward as a single fused Pallas call.

    Args:
      G:          (B, GS, N, N) adjacency (one channel per bond order; small integers).
      x:          (B, N, C_in)  node features.
      input_mask: (B, N)        vertex existence mask.
      weights:    list of (GS, C_l, P_l) per-layer, per-channel Linear weights (pre-transposed).
      biases:     list of (GS, P_l) per-layer, per-channel Linear biases.
    Returns:
      (B, N, P_last) float32, or stacked intermediates (..., K) if return_every_n > 0.
    """
    B, GS, N, _ = G.shape
    L = len(weights)
    assert L >= 1 and len(biases) == L
    assert input_mask.shape == (B, N)
    dims = [x.shape[-1]] + [int(W.shape[-1]) for W in weights]
    for li, (W, b) in enumerate(zip(weights, biases)):
        assert W.shape == (GS, dims[li], dims[li + 1])
        assert b.shape == (GS, dims[li + 1])

    if batch_tile is None:
        batch_tile = _pick_batch_tile(B, GS, N, dims)
    tb = batch_tile
    assert B % tb == 0

    # bf16 for G (bond orders are small integers -> exact) and W (MXU-native); f32 elsewhere.
    G_in = G.astype(jnp.bfloat16)
    x_in = x.astype(jnp.float32)
    mask3 = input_mask.astype(jnp.float32).reshape(B, N, 1)
    w_in = [W.astype(jnp.bfloat16) for W in weights]
    b_in = [b.astype(jnp.float32) for b in biases]

    residual_flags = tuple(bool(resnet) and dims[li] == dims[li + 1] for li in range(L))
    if return_every_n > 0:
        out_layer_ids = tuple(li for li in range(L)
                              if li % return_every_n == return_every_n - 1)
    else:
        out_layer_ids = (L - 1,)

    out_shapes = tuple(jax.ShapeDtypeStruct((B, N, dims[li + 1]), jnp.float32)
                       for li in out_layer_ids)
    out_specs = tuple(pl.BlockSpec((tb, N, dims[li + 1]), lambda i: (i, 0, 0))
                      for li in out_layer_ids)

    in_specs = [
        pl.BlockSpec((tb, GS, N, N), lambda i: (i, 0, 0, 0)),     # G (all channels, bf16)
        pl.BlockSpec((tb, N, dims[0]), lambda i: (i, 0, 0)),      # x
        pl.BlockSpec((tb, N, 1), lambda i: (i, 0, 0)),            # mask
    ]
    for li in range(L):
        in_specs.append(pl.BlockSpec((GS, dims[li], dims[li + 1]),
                                     lambda i: (0, 0, 0)))        # W_l (VMEM resident)
    for li in range(L):
        in_specs.append(pl.BlockSpec((GS, dims[li + 1]),
                                     lambda i: (0, 0)))           # b_l (VMEM resident)

    if vmem_limit_bytes is None:
        est = _vmem_estimate_bytes(tb, GS, N, dims)
        # Never below the default scoped budget; always below v7x's 64 MiB physical VMEM.
        vmem_limit_bytes = min(56 << 20, max(32 << 20, 2 * est))

    kernel = functools.partial(_fused_all_layers_kernel,
                               n_layers=L,
                               residual_flags=residual_flags,
                               out_layer_ids=out_layer_ids)

    outs = pl.pallas_call(
        kernel,
        out_shape=out_shapes if len(out_shapes) > 1 else out_shapes[0],
        grid_spec=pltpu.PrefetchScalarGridSpec(
            num_scalar_prefetch=0,
            grid=(B // tb,),
            in_specs=in_specs,
            out_specs=list(out_specs) if len(out_specs) > 1 else out_specs[0],
        ),
        compiler_params=pltpu.CompilerParams(
            dimension_semantics=("parallel",),      # megacore-shardable on v7x (grid >= 2)
            vmem_limit_bytes=vmem_limit_bytes),
    )(G_in, x_in, mask3, *w_in, *b_in)

    if return_every_n > 0:
        outs_t = outs if isinstance(outs, (tuple, list)) else (outs,)
        return jnp.stack(outs_t, axis=-1)
    return outs


def _reference(G, x, input_mask, weights, biases, *, resnet=False):
    """Pure-JAX f32 mirror of the PyTorch forward (highest matmul precision)."""
    hi = jax.lax.Precision.HIGHEST
    x = x.astype(jnp.float32)
    for W, b in zip(weights, biases):
        y = jnp.einsum("bnc,scp->bsnp", x, W, precision=hi) + b[None, :, None, :]
        z = jnp.einsum("bsnm,bsmp->bsnp", G, y, precision=hi)
        z = jnp.maximum(z, 0.0)
        x2 = jnp.max(z, axis=1)                                   # agg over GS
        if resnet and x.shape == x2.shape:
            x2 = x2 + x
        m = input_mask + _EPS                                     # (B, N)
        xm = x2 * m[:, :, None]
        vc = jnp.sum(m, axis=1)
        mean = jnp.sum(xm, axis=1) / (vc[:, None] + _EPS)
        xmm = (xm - mean[:, None, :]) * m[:, :, None]
        var = jnp.sum(xmm ** 2, axis=1) / (vc[:, None] + _EPS)
        x = xmm / jnp.sqrt(var + _EPS)[:, None, :]
    return x


def _q(a, scale):
    # Quantize test values so they are exactly representable in bf16 (robust comparison).
    return jnp.round(a * scale) / scale


if __name__ == "__main__":
    B, GS, N = 2, 4, 32
    C_in = 16
    output_features_n = (32, 32)   # two stacked layers

    key = jax.random.PRNGKey(0)
    kG, kx, *kwb = jax.random.split(key, 2 + 2 * len(output_features_n))

    # Integer bond-order-style adjacency -> exact under the bf16 cast in the wrapper.
    G = jax.random.randint(kG, (B, GS, N, N), 0, 4).astype(jnp.float32)
    x = _q(jax.random.normal(kx, (B, N, C_in), dtype=jnp.float32), 8.0)
    # Per-graph vertex mask: only the first n_valid[b] atoms exist.
    n_valid = jnp.array([24, 17], dtype=jnp.int32)
    input_mask = (jnp.arange(N)[None, :] < n_valid[:, None]).astype(jnp.float32)

    fdims = (C_in,) + tuple(output_features_n)
    weights, biases = [], []
    for li in range(len(output_features_n)):
        kwl, kbl = kwb[2 * li], kwb[2 * li + 1]
        weights.append(_q(0.5 * jax.random.normal(kwl, (GS, fdims[li], fdims[li + 1]),
                                                  dtype=jnp.float32), 16.0))
        biases.append(_q(0.1 * jax.random.normal(kbl, (GS, fdims[li + 1]),
                                                 dtype=jnp.float32), 32.0))

    out = graph_mat_layers_instance_norm(G, x, input_mask, weights, biases, resnet=False)
    out = jax.block_until_ready(out)

    ref = _reference(G, x, input_mask, weights, biases, resnet=False)
    assert out.shape == (B, N, output_features_n[-1]), out.shape
    max_err = float(jnp.max(jnp.abs(out - ref)))
    # bf16 MXU operands (with f32 accumulation) vs an f32 Precision.HIGHEST reference.
    assert jnp.allclose(out, ref, atol=5e-2, rtol=5e-2), \
        f"mismatch vs reference, max_err={max_err}"
    print("KERNEL_OK")
</pallas_src>

<mosaic_0001>
module attributes {stable_mosaic.version = 11 : i64} {
  func.func @_fused_all_layers_kernel(%arg0: i32, %arg1: memref<1x4x32x32xbf16, #tpu.memory_space<vmem>>, %arg2: memref<1x32x16xf32, #tpu.memory_space<vmem>>, %arg3: memref<1x32x1xf32, #tpu.memory_space<vmem>>, %arg4: memref<4x16x32xbf16, #tpu.memory_space<vmem>>, %arg5: memref<4x32x32xbf16, #tpu.memory_space<vmem>>, %arg6: memref<4x32xf32, #tpu.memory_space<vmem>>, %arg7: memref<4x32xf32, #tpu.memory_space<vmem>>, %arg8: memref<1x32x32xf32, #tpu.memory_space<vmem>>) attributes {dimension_semantics = [#tpu.dimension_semantics<parallel>], iteration_bounds = array<i64: 2>, scalar_prefetch = 0 : i64, scratch_operands = 0 : i64, tpu.core_type = #tpu.core_type<tc>, window_params = [{transform_indices = @transform_0, window_bounds = array<i64: 1, 4, 32, 32>}, {transform_indices = @transform_1, window_bounds = array<i64: 1, 32, 16>}, {transform_indices = @transform_2, window_bounds = array<i64: 1, 32, 1>}, {pipeline_mode = #tpu.pipeline_mode<synchronous>, transform_indices = @transform_3, window_bounds = array<i64: 4, 16, 32>}, {pipeline_mode = #tpu.pipeline_mode<synchronous>, transform_indices = @transform_4, window_bounds = array<i64: 4, 32, 32>}, {pipeline_mode = #tpu.pipeline_mode<synchronous>, transform_indices = @transform_5, window_bounds = array<i64: 4, 32>}, {pipeline_mode = #tpu.pipeline_mode<synchronous>, transform_indices = @transform_6, window_bounds = array<i64: 4, 32>}, {transform_indices = @transform_7, window_bounds = array<i64: 1, 32, 32>}]} {
    %c0 = arith.constant 0 : index
    %c0_0 = arith.constant 0 : index
    %c0_1 = arith.constant 0 : index
    %c0_2 = arith.constant 0 : index
    %0 = vector.load %arg1[%c0, %c0_0, %c0_1, %c0_2] : memref<1x4x32x32xbf16, #tpu.memory_space<vmem>>, vector<1x4x32x32xbf16>
    %1 = vector.shape_cast %0 : vector<1x4x32x32xbf16> to vector<1x128x32xbf16>
    %2 = arith.extf %1 : vector<1x128x32xbf16> to vector<1x128x32xf32>
    %cst = arith.constant dense<0.000000e+00> : vector<1x128xf32>
    %3 = vector.multi_reduction <add>, %2, %cst [2] : vector<1x128x32xf32> to vector<1x128xf32>
    %4 = vector.shape_cast %3 : vector<1x128xf32> to vector<1x128x1xf32>
    %c0_3 = arith.constant 0 : index
    %c0_4 = arith.constant 0 : index
    %c0_5 = arith.constant 0 : index
    %5 = vector.load %arg3[%c0_3, %c0_4, %c0_5] : memref<1x32x1xf32, #tpu.memory_space<vmem>>, vector<1x32x1xf32>
    %cst_6 = arith.constant 9.99999974E-6 : f32
    %6 = vector.broadcast %cst_6 : f32 to vector<1x32x1xf32>
    %7 = arith.addf %5, %6 : vector<1x32x1xf32>
    %cst_7 = arith.constant dense<0.000000e+00> : vector<1x1xf32>
    %8 = vector.multi_reduction <add>, %7, %cst_7 [1] : vector<1x32x1xf32> to vector<1x1xf32>
    %9 = vector.shape_cast %8 : vector<1x1xf32> to vector<1x1x1xf32>
    %cst_8 = arith.constant 9.99999974E-6 : f32
    %10 = vector.broadcast %cst_8 : f32 to vector<1x1x1xf32>
    %11 = arith.addf %9, %10 : vector<1x1x1xf32>
    %12 = tpu.reciprocal %11 {approx = true} : vector<1x1x1xf32> -> vector<1x1x1xf32>
    %c0_9 = arith.constant 0 : index
    %c0_10 = arith.constant 0 : index
    %c0_11 = arith.constant 0 : index
    %13 = vector.load %arg2[%c0_9, %c0_10, %c0_11] : memref<1x32x16xf32, #tpu.memory_space<vmem>>, vector<1x32x16xf32>
    %c0_12 = arith.constant 0 : index
    %c0_13 = arith.constant 0 : index
    %c0_14 = arith.constant 0 : index
    %14 = vector.load %arg4[%c0_12, %c0_13, %c0_14] : memref<4x16x32xbf16, #tpu.memory_space<vmem>>, vector<4x16x32xbf16>
    %c0_15 = arith.constant 0 : index
    %c0_16 = arith.constant 0 : index
    %15 = vector.load %arg6[%c0_15, %c0_16] : memref<4x32xf32, #tpu.memory_space<vmem>>, vector<4x32xf32>
    %16 = arith.truncf %13 : vector<1x32x16xf32> to vector<1x32x16xbf16>
    "tpu.trace_start"() <{level = 10 : i32, message = "bkm,bmc->bkc"}> : () -> ()
    %cst_17 = arith.constant dense<0.000000e+00> : vector<1x128x16xf32>
    %17 = tpu.matmul %1, %16, %cst_17 {dimension_numbers = #tpu.dot_dimension_numbers<[2], [1], [1], [2], [0, 0, 0, 1, 1, 2], [0], [0]>} : vector<1x128x32xbf16>, vector<1x32x16xbf16>, vector<1x128x16xf32> -> vector<1x128x16xf32>
    "tpu.trace_stop"() : () -> ()
    %18 = arith.truncf %17 : vector<1x128x16xf32> to vector<1x128x16xbf16>
    %19 = vector.extract_strided_slice %18 {offsets = [0, 0, 0], sizes = [1, 32, 16], strides = [1, 1, 1]} : vector<1x128x16xbf16> to vector<1x32x16xbf16>
    %20 = vector.shape_cast %19 : vector<1x32x16xbf16> to vector<32x16xbf16>
    %21 = vector.extract_strided_slice %14 {offsets = [0, 0, 0], sizes = [1, 16, 32], strides = [1, 1, 1]} : vector<4x16x32xbf16> to vector<1x16x32xbf16>
    %22 = vector.shape_cast %21 : vector<1x16x32xbf16> to vector<16x32xbf16>
    %cst_18 = arith.constant dense<0.000000e+00> : vector<32x32xf32>
    %23 = tpu.matmul %20, %22, %cst_18 {dimension_numbers = #tpu.dot_dimension_numbers<[1], [0], [0], [1], [0, 0, 1, 1], [], []>} : vector<32x16xbf16>, vector<16x32xbf16>, vector<32x32xf32> -> vector<32x32xf32>
    %24 = vector.shape_cast %23 : vector<32x32xf32> to vector<1x32x32xf32>
    %25 = vector.extract_strided_slice %4 {offsets = [0, 0, 0], sizes = [1, 32, 1], strides = [1, 1, 1]} : vector<1x128x1xf32> to vector<1x32x1xf32>
    %26 = vector.extract_strided_slice %15 {offsets = [0, 0], sizes = [1, 32], strides = [1, 1]} : vector<4x32xf32> to vector<1x32xf32>
    %27 = vector.shape_cast %26 : vector<1x32xf32> to vector<32xf32>
    %28 = vector.shape_cast %27 : vector<32xf32> to vector<1x1x32xf32>
    %29 = vector.broadcast %25 : vector<1x32x1xf32> to vector<1x32x32xf32>
    %30 = vector.broadcast %28 : vector<1x1x32xf32> to vector<1x32x32xf32>
    %31 = arith.mulf %29, %30 : vector<1x32x32xf32>
    %32 = arith.addf %24, %31 : vector<1x32x32xf32>
    %cst_19 = arith.constant 0.000000e+00 : f32
    %33 = vector.broadcast %cst_19 : f32 to vector<1x32x32xf32>
    %34 = arith.maximumf %32, %33 : vector<1x32x32xf32>
    %35 = vector.extract_strided_slice %18 {offsets = [0, 32, 0], sizes = [1, 32, 16], strides = [1, 1, 1]} : vector<1x128x16xbf16> to vector<1x32x16xbf16>
    %36 = vector.shape_cast %35 : vector<1x32x16xbf16> to vector<32x16xbf16>
    %37 = vector.extract_strided_slice %14 {offsets = [1, 0, 0], sizes = [1, 16, 32], strides = [1, 1, 1]} : vector<4x16x32xbf16> to vector<1x16x32xbf16>
    %38 = vector.shape_cast %37 : vector<1x16x32xbf16> to vector<16x32xbf16>
    %cst_20 = arith.constant dense<0.000000e+00> : vector<32x32xf32>
    %39 = tpu.matmul %36, %38, %cst_20 {dimension_numbers = #tpu.dot_dimension_numbers<[1], [0], [0], [1], [0, 0, 1, 1], [], []>} : vector<32x16xbf16>, vector<16x32xbf16>, vector<32x32xf32> -> vector<32x32xf32>
    %40 = vector.shape_cast %39 : vector<32x32xf32> to vector<1x32x32xf32>
    %41 = vector.extract_strided_slice %4 {offsets = [0, 32, 0], sizes = [1, 32, 1], strides = [1, 1, 1]} : vector<1x128x1xf32> to vector<1x32x1xf32>
    %42 = vector.extract_strided_slice %15 {offsets = [1, 0], sizes = [1, 32], strides = [1, 1]} : vector<4x32xf32> to vector<1x32xf32>
    %43 = vector.shape_cast %42 : vector<1x32xf32> to vector<32xf32>
    %44 = vector.shape_cast %43 : vector<32xf32> to vector<1x1x32xf32>
    %45 = vector.broadcast %41 : vector<1x32x1xf32> to vector<1x32x32xf32>
    %46 = vector.broadcast %44 : vector<1x1x32xf32> to vector<1x32x32xf32>
    %47 = arith.mulf %45, %46 : vector<1x32x32xf32>
    %48 = arith.addf %40, %47 : vector<1x32x32xf32>
    %cst_21 = arith.constant 0.000000e+00 : f32
    %49 = vector.broadcast %cst_21 : f32 to vector<1x32x32xf32>
    %50 = arith.maximumf %48, %49 : vector<1x32x32xf32>
    %51 = arith.maximumf %34, %50 : vector<1x32x32xf32>
    %52 = vector.extract_strided_slice %18 {offsets = [0, 64, 0], sizes = [1, 32, 16], strides = [1, 1, 1]} : vector<1x128x16xbf16> to vector<1x32x16xbf16>
    %53 = vector.shape_cast %52 : vector<1x32x16xbf16> to vector<32x16xbf16>
    %54 = vector.extract_strided_slice %14 {offsets = [2, 0, 0], sizes = [1, 16, 32], strides = [1, 1, 1]} : vector<4x16x32xbf16> to vector<1x16x32xbf16>
    %55 = vector.shape_cast %54 : vector<1x16x32xbf16> to vector<16x32xbf16>
    %cst_22 = arith.constant dense<0.000000e+00> : vector<32x32xf32>
    %56 = tpu.matmul %53, %55, %cst_22 {dimension_numbers = #tpu.dot_dimension_numbers<[1], [0], [0], [1], [0, 0, 1, 1], [], []>} : vector<32x16xbf16>, vector<16x32xbf16>, vector<32x32xf32> -> vector<32x32xf32>
    %57 = vector.shape_cast %56 : vector<32x32xf32> to vector<1x32x32xf32>
    %58 = vector.extract_strided_slice %4 {offsets = [0, 64, 0], sizes = [1, 32, 1], strides = [1, 1, 1]} : vector<1x128x1xf32> to vector<1x32x1xf32>
    %59 = vector.extract_strided_slice %15 {offsets = [2, 0], sizes = [1, 32], strides = [1, 1]} : vector<4x32xf32> to vector<1x32xf32>
    %60 = vector.shape_cast %59 : vector<1x32xf32> to vector<32xf32>
    %61 = vector.shape_cast %60 : vector<32xf32> to vector<1x1x32xf32>
    %62 = vector.broadcast %58 : vector<1x32x1xf32> to vector<1x32x32xf32>
    %63 = vector.broadcast %61 : vector<1x1x32xf32> to vector<1x32x32xf32>
    %64 = arith.mulf %62, %63 : vector<1x32x32xf32>
    %65 = arith.addf %57, %64 : vector<1x32x32xf32>
    %cst_23 = arith.constant 0.000000e+00 : f32
    %66 = vector.broadcast %cst_23 : f32 to vector<1x32x32xf32>
    %67 = arith.maximumf %65, %66 : vector<1x32x32xf32>
    %68 = arith.maximumf %51, %67 : vector<1x32x32xf32>
    %69 = vector.extract_strided_slice %18 {offsets = [0, 96, 0], sizes = [1, 32, 16], strides = [1, 1, 1]} : vector<1x128x16xbf16> to vector<1x32x16xbf16>
    %70 = vector.shape_cast %69 : vector<1x32x16xbf16> to vector<32x16xbf16>
    %71 = vector.extract_strided_slice %14 {offsets = [3, 0, 0], sizes = [1, 16, 32], strides = [1, 1, 1]} : vector<4x16x32xbf16> to vector<1x16x32xbf16>
    %72 = vector.shape_cast %71 : vector<1x16x32xbf16> to vector<16x32xbf16>
    %cst_24 = arith.constant dense<0.000000e+00> : vector<32x32xf32>
    %73 = tpu.matmul %70, %72, %cst_24 {dimension_numbers = #tpu.dot_dimension_numbers<[1], [0], [0], [1], [0, 0, 1, 1], [], []>} : vector<32x16xbf16>, vector<16x32xbf16>, vector<32x32xf32> -> vector<32x32xf32>
    %74 = vector.shape_cast %73 : vector<32x32xf32> to vector<1x32x32xf32>
    %75 = vector.extract_strided_slice %4 {offsets = [0, 96, 0], sizes = [1, 32, 1], strides = [1, 1, 1]} : vector<1x128x1xf32> to vector<1x32x1xf32>
    %76 = vector.extract_strided_slice %15 {offsets = [3, 0], sizes = [1, 32], strides = [1, 1]} : vector<4x32xf32> to vector<1x32xf32>
    %77 = vector.shape_cast %76 : vector<1x32xf32> to vector<32xf32>
    %78 = vector.shape_cast %77 : vector<32xf32> to vector<1x1x32xf32>
    %79 = vector.broadcast %75 : vector<1x32x1xf32> to vector<1x32x32xf32>
    %80 = vector.broadcast %78 : vector<1x1x32xf32> to vector<1x32x32xf32>
    %81 = arith.mulf %79, %80 : vector<1x32x32xf32>
    %82 = arith.addf %74, %81 : vector<1x32x32xf32>
    %cst_25 = arith.constant 0.000000e+00 : f32
    %83 = vector.broadcast %cst_25 : f32 to vector<1x32x32xf32>
    %84 = arith.maximumf %82, %83 : vector<1x32x32xf32>
    %85 = arith.maximumf %68, %84 : vector<1x32x32xf32>
    %86 = vector.broadcast %7 : vector<1x32x1xf32> to vector<1x32x32xf32>
    %87 = arith.mulf %85, %86 : vector<1x32x32xf32>
    %cst_26 = arith.constant dense<0.000000e+00> : vector<1x32xf32>
    %88 = vector.multi_reduction <add>, %87, %cst_26 [1] : vector<1x32x32xf32> to vector<1x32xf32>
    %89 = vector.shape_cast %88 : vector<1x32xf32> to vector<1x1x32xf32>
    %90 = vector.broadcast %12 : vector<1x1x1xf32> to vector<1x1x32xf32>
    %91 = arith.mulf %89, %90 : vector<1x1x32xf32>
    %92 = vector.broadcast %91 : vector<1x1x32xf32> to vector<1x32x32xf32>
    %93 = arith.subf %87, %92 : vector<1x32x32xf32>
    %94 = vector.broadcast %7 : vector<1x32x1xf32> to vector<1x32x32xf32>
    %95 = arith.mulf %93, %94 : vector<1x32x32xf32>
    %96 = arith.mulf %95, %95 : vector<1x32x32xf32>
    %cst_27 = arith.constant dense<0.000000e+00> : vector<1x32xf32>
    %97 = vector.multi_reduction <add>, %96, %cst_27 [1] : vector<1x32x32xf32> to vector<1x32xf32>
    %98 = vector.shape_cast %97 : vector<1x32xf32> to vector<1x1x32xf32>
    %99 = vector.broadcast %12 : vector<1x1x1xf32> to vector<1x1x32xf32>
    %100 = arith.mulf %98, %99 : vector<1x1x32xf32>
    %cst_28 = arith.constant 9.99999974E-6 : f32
    %101 = vector.broadcast %cst_28 : f32 to vector<1x1x32xf32>
    %102 = arith.addf %100, %101 : vector<1x1x32xf32>
    %103 = math.rsqrt %102 : vector<1x1x32xf32>
    %104 = vector.broadcast %103 : vector<1x1x32xf32> to vector<1x32x32xf32>
    %105 = arith.mulf %95, %104 : vector<1x32x32xf32>
    %c0_29 = arith.constant 0 : index
    %c0_30 = arith.constant 0 : index
    %c0_31 = arith.constant 0 : index
    %106 = vector.load %arg5[%c0_29, %c0_30, %c0_31] : memref<4x32x32xbf16, #tpu.memory_space<vmem>>, vector<4x32x32xbf16>
    %c0_32 = arith.constant 0 : index
    %c0_33 = arith.constant 0 : index
    %107 = vector.load %arg7[%c0_32, %c0_33] : memref<4x32xf32, #tpu.memory_space<vmem>>, vector<4x32xf32>
    %108 = arith.truncf %105 : vector<1x32x32xf32> to vector<1x32x32xbf16>
    "tpu.trace_start"() <{level = 10 : i32, message = "bkm,bmc->bkc"}> : () -> ()
    %cst_34 = arith.constant dense<0.000000e+00> : vector<1x128x32xf32>
    %109 = tpu.matmul %1, %108, %cst_34 {dimension_numbers = #tpu.dot_dimension_numbers<[2], [1], [1], [2], [0, 0, 0, 1, 1, 2], [0], [0]>} : vector<1x128x32xbf16>, vector<1x32x32xbf16>, vector<1x128x32xf32> -> vector<1x128x32xf32>
    "tpu.trace_stop"() : () -> ()
    %110 = arith.truncf %109 : vector<1x128x32xf32> to vector<1x128x32xbf16>
    %111 = vector.extract_strided_slice %110 {offsets = [0, 0, 0], sizes = [1, 32, 32], strides = [1, 1, 1]} : vector<1x128x32xbf16> to vector<1x32x32xbf16>
    %112 = vector.shape_cast %111 : vector<1x32x32xbf16> to vector<32x32xbf16>
    %113 = vector.extract_strided_slice %106 {offsets = [0, 0, 0], sizes = [1, 32, 32], strides = [1, 1, 1]} : vector<4x32x32xbf16> to vector<1x32x32xbf16>
    %114 = vector.shape_cast %113 : vector<1x32x32xbf16> to vector<32x32xbf16>
    %cst_35 = arith.constant dense<0.000000e+00> : vector<32x32xf32>
    %115 = tpu.matmul %112, %114, %cst_35 {dimension_numbers = #tpu.dot_dimension_numbers<[1], [0], [0], [1], [0, 0, 1, 1], [], []>} : vector<32x32xbf16>, vector<32x32xbf16>, vector<32x32xf32> -> vector<32x32xf32>
    %116 = vector.shape_cast %115 : vector<32x32xf32> to vector<1x32x32xf32>
    %117 = vector.extract_strided_slice %4 {offsets = [0, 0, 0], sizes = [1, 32, 1], strides = [1, 1, 1]} : vector<1x128x1xf32> to vector<1x32x1xf32>
    %118 = vector.extract_strided_slice %107 {offsets = [0, 0], sizes = [1, 32], strides = [1, 1]} : vector<4x32xf32> to vector<1x32xf32>
    %119 = vector.shape_cast %118 : vector<1x32xf32> to vector<32xf32>
    %120 = vector.shape_cast %119 : vector<32xf32> to vector<1x1x32xf32>
    %121 = vector.broadcast %117 : vector<1x32x1xf32> to vector<1x32x32xf32>
    %122 = vector.broadcast %120 : vector<1x1x32xf32> to vector<1x32x32xf32>
    %123 = arith.mulf %121, %122 : vector<1x32x32xf32>
    %124 = arith.addf %116, %123 : vector<1x32x32xf32>
    %cst_36 = arith.constant 0.000000e+00 : f32
    %125 = vector.broadcast %cst_36 : f32 to vector<1x32x32xf32>
    %126 = arith.maximumf %124, %125 : vector<1x32x32xf32>
    %127 = vector.extract_strided_slice %110 {offsets = [0, 32, 0], sizes = [1, 32, 32], strides = [1, 1, 1]} : vector<1x128x32xbf16> to vector<1x32x32xbf16>
    %128 = vector.shape_cast %127 : vector<1x32x32xbf16> to vector<32x32xbf16>
    %129 = vector.extract_strided_slice %106 {offsets = [1, 0, 0], sizes = [1, 32, 32], strides = [1, 1, 1]} : vector<4x32x32xbf16> to vector<1x32x32xbf16>
    %130 = vector.shape_cast %129 : vector<1x32x32xbf16> to vector<32x32xbf16>
    %cst_37 = arith.constant dense<0.000000e+00> : vector<32x32xf32>
    %131 = tpu.matmul %128, %130, %cst_37 {dimension_numbers = #tpu.dot_dimension_numbers<[1], [0], [0], [1], [0, 0, 1, 1], [], []>} : vector<32x32xbf16>, vector<32x32xbf16>, vector<32x32xf32> -> vector<32x32xf32>
    %132 = vector.shape_cast %131 : vector<32x32xf32> to vector<1x32x32xf32>
    %133 = vector.extract_strided_slice %4 {offsets = [0, 32, 0], sizes = [1, 32, 1], strides = [1, 1, 1]} : vector<1x128x1xf32> to vector<1x32x1xf32>
    %134 = vector.extract_strided_slice %107 {offsets = [1, 0], sizes = [1, 32], strides = [1, 1]} : vector<4x32xf32> to vector<1x32xf32>
    %135 = vector.shape_cast %134 : vector<1x32xf32> to vector<32xf32>
    %136 = vector.shape_cast %135 : vector<32xf32> to vector<1x1x32xf32>
    %137 = vector.broadcast %133 : vector<1x32x1xf32> to vector<1x32x32xf32>
    %138 = vector.broadcast %136 : vector<1x1x32xf32> to vector<1x32x32xf32>
    %139 = arith.mulf %137, %138 : vector<1x32x32xf32>
    %140 = arith.addf %132, %139 : vector<1x32x32xf32>
    %cst_38 = arith.constant 0.000000e+00 : f32
    %141 = vector.broadcast %cst_38 : f32 to vector<1x32x32xf32>
    %142 = arith.maximumf %140, %141 : vector<1x32x32xf32>
    %143 = arith.maximumf %126, %142 : vector<1x32x32xf32>
    %144 = vector.extract_strided_slice %110 {offsets = [0, 64, 0], sizes = [1, 32, 32], strides = [1, 1, 1]} : vector<1x128x32xbf16> to vector<1x32x32xbf16>
    %145 = vector.shape_cast %144 : vector<1x32x32xbf16> to vector<32x32xbf16>
    %146 = vector.extract_strided_slice %106 {offsets = [2, 0, 0], sizes = [1, 32, 32], strides = [1, 1, 1]} : vector<4x32x32xbf16> to vector<1x32x32xbf16>
    %147 = vector.shape_cast %146 : vector<1x32x32xbf16> to vector<32x32xbf16>
    %cst_39 = arith.constant dense<0.000000e+00> : vector<32x32xf32>
    %148 = tpu.matmul %145, %147, %cst_39 {dimension_numbers = #tpu.dot_dimension_numbers<[1], [0], [0], [1], [0, 0, 1, 1], [], []>} : vector<32x32xbf16>, vector<32x32xbf16>, vector<32x32xf32> -> vector<32x32xf32>
    %149 = vector.shape_cast %148 : vector<32x32xf32> to vector<1x32x32xf32>
    %150 = vector.extract_strided_slice %4 {offsets = [0, 64, 0], sizes = [1, 32, 1], strides = [1, 1, 1]} : vector<1x128x1xf32> to vector<1x32x1xf32>
    %151 = vector.extract_strided_slice %107 {offsets = [2, 0], sizes = [1, 32], strides = [1, 1]} : vector<4x32xf32> to vector<1x32xf32>
    %152 = vector.shape_cast %151 : vector<1x32xf32> to vector<32xf32>
    %153 = vector.shape_cast %152 : vector<32xf32> to vector<1x1x32xf32>
    %154 = vector.broadcast %150 : vector<1x32x1xf32> to vector<1x32x32xf32>
    %155 = vector.broadcast %153 : vector<1x1x32xf32> to vector<1x32x32xf32>
    %156 = arith.mulf %154, %155 : vector<1x32x32xf32>
    %157 = arith.addf %149, %156 : vector<1x32x32xf32>
    %cst_40 = arith.constant 0.000000e+00 : f32
    %158 = vector.broadcast %cst_40 : f32 to vector<1x32x32xf32>
    %159 = arith.maximumf %157, %158 : vector<1x32x32xf32>
    %160 = arith.maximumf %143, %159 : vector<1x32x32xf32>
    %161 = vector.extract_strided_slice %110 {offsets = [0, 96, 0], sizes = [1, 32, 32], strides = [1, 1, 1]} : vector<1x128x32xbf16> to vector<1x32x32xbf16>
    %162 = vector.shape_cast %161 : vector<1x32x32xbf16> to vector<32x32xbf16>
    %163 = vector.extract_strided_slice %106 {offsets = [3, 0, 0], sizes = [1, 32, 32], strides = [1, 1, 1]} : vector<4x32x32xbf16> to vector<1x32x32xbf16>
    %164 = vector.shape_cast %163 : vector<1x32x32xbf16> to vector<32x32xbf16>
    %cst_41 = arith.constant dense<0.000000e+00> : vector<32x32xf32>
    %165 = tpu.matmul %162, %164, %cst_41 {dimension_numbers = #tpu.dot_dimension_numbers<[1], [0], [0], [1], [0, 0, 1, 1], [], []>} : vector<32x32xbf16>, vector<32x32xbf16>, vector<32x32xf32> -> vector<32x32xf32>
    %166 = vector.shape_cast %165 : vector<32x32xf32> to vector<1x32x32xf32>
    %167 = vector.extract_strided_slice %4 {offsets = [0, 96, 0], sizes = [1, 32, 1], strides = [1, 1, 1]} : vector<1x128x1xf32> to vector<1x32x1xf32>
    %168 = vector.extract_strided_slice %107 {offsets = [3, 0], sizes = [1, 32], strides = [1, 1]} : vector<4x32xf32> to vector<1x32xf32>
    %169 = vector.shape_cast %168 : vector<1x32xf32> to vector<32xf32>
    %170 = vector.shape_cast %169 : vector<32xf32> to vector<1x1x32xf32>
    %171 = vector.broadcast %167 : vector<1x32x1xf32> to vector<1x32x32xf32>
    %172 = vector.broadcast %170 : vector<1x1x32xf32> to vector<1x32x32xf32>
    %173 = arith.mulf %171, %172 : vector<1x32x32xf32>
    %174 = arith.addf %166, %173 : vector<1x32x32xf32>
    %cst_42 = arith.constant 0.000000e+00 : f32
    %175 = vector.broadcast %cst_42 : f32 to vector<1x32x32xf32>
    %176 = arith.maximumf %174, %175 : vector<1x32x32xf32>
    %177 = arith.maximumf %160, %176 : vector<1x32x32xf32>
    %178 = vector.broadcast %7 : vector<1x32x1xf32> to vector<1x32x32xf32>
    %179 = arith.mulf %177, %178 : vector<1x32x32xf32>
    %cst_43 = arith.constant dense<0.000000e+00> : vector<1x32xf32>
    %180 = vector.multi_reduction <add>, %179, %cst_43 [1] : vector<1x32x32xf32> to vector<1x32xf32>
    %181 = vector.shape_cast %180 : vector<1x32xf32> to vector<1x1x32xf32>
    %182 = vector.broadcast %12 : vector<1x1x1xf32> to vector<1x1x32xf32>
    %183 = arith.mulf %181, %182 : vector<1x1x32xf32>
    %184 = vector.broadcast %183 : vector<1x1x32xf32> to vector<1x32x32xf32>
    %185 = arith.subf %179, %184 : vector<1x32x32xf32>
    %186 = vector.broadcast %7 : vector<1x32x1xf32> to vector<1x32x32xf32>
    %187 = arith.mulf %185, %186 : vector<1x32x32xf32>
    %188 = arith.mulf %187, %187 : vector<1x32x32xf32>
    %cst_44 = arith.constant dense<0.000000e+00> : vector<1x32xf32>
    %189 = vector.multi_reduction <add>, %188, %cst_44 [1] : vector<1x32x32xf32> to vector<1x32xf32>
    %190 = vector.shape_cast %189 : vector<1x32xf32> to vector<1x1x32xf32>
    %191 = vector.broadcast %12 : vector<1x1x1xf32> to vector<1x1x32xf32>
    %192 = arith.mulf %190, %191 : vector<1x1x32xf32>
    %cst_45 = arith.constant 9.99999974E-6 : f32
    %193 = vector.broadcast %cst_45 : f32 to vector<1x1x32xf32>
    %194 = arith.addf %192, %193 : vector<1x1x32xf32>
    %195 = math.rsqrt %194 : vector<1x1x32xf32>
    %196 = vector.broadcast %195 : vector<1x1x32xf32> to vector<1x32x32xf32>
    %197 = arith.mulf %187, %196 : vector<1x32x32xf32>
    %c0_46 = arith.constant 0 : index
    %c0_47 = arith.constant 0 : index
    %c0_48 = arith.constant 0 : index
    %198 = vector.load %arg8[%c0_46, %c0_47, %c0_48] : memref<1x32x32xf32, #tpu.memory_space<vmem>>, vector<1x32x32xf32>
    tpu.vector_store %arg8[%c0_46, %c0_47, %c0_48], %197 {strides = array<i32>} : memref<1x32x32xf32, #tpu.memory_space<vmem>>, vector<1x32x32xf32>,
    return
  }
  func.func @transform_0(%arg0: i32) -> (i32, i32, i32, i32) {
    %c0_i32 = arith.constant 0 : i32
    %c0_i32_0 = arith.constant 0 : i32
    %c0_i32_1 = arith.constant 0 : i32
    %c0_i32_2 = arith.constant 0 : i32
    return %arg0, %c0_i32, %c0_i32_0, %c0_i32_1 : i32, i32, i32, i32
  }
  func.func @transform_1(%arg0: i32) -> (i32, i32, i32) {
    %c0_i32 = arith.constant 0 : i32
    %c0_i32_0 = arith.constant 0 : i32
    %c0_i32_1 = arith.constant 0 : i32
    return %arg0, %c0_i32, %c0_i32_0 : i32, i32, i32
  }
  func.func @transform_2(%arg0: i32) -> (i32, i32, i32) {
    %c0_i32 = arith.constant 0 : i32
    %c0_i32_0 = arith.constant 0 : i32
    %c0_i32_1 = arith.constant 0 : i32
    return %arg0, %c0_i32, %c0_i32_0 : i32, i32, i32
  }
  func.func @transform_3(%arg0: i32) -> (i32, i32, i32) {
    %c0_i32 = arith.constant 0 : i32
    %c0_i32_0 = arith.constant 0 : i32
    %c0_i32_1 = arith.constant 0 : i32
    %c0_i32_2 = arith.constant 0 : i32
    return %c0_i32, %c0_i32_0, %c0_i32_1 : i32, i32, i32
  }
  func.func @transform_4(%arg0: i32) -> (i32, i32, i32) {
    %c0_i32 = arith.constant 0 : i32
    %c0_i32_0 = arith.constant 0 : i32
    %c0_i32_1 = arith.constant 0 : i32
    %c0_i32_2 = arith.constant 0 : i32
    return %c0_i32, %c0_i32_0, %c0_i32_1 : i32, i32, i32
  }
  func.func @transform_5(%arg0: i32) -> (i32, i32) {
    %c0_i32 = arith.constant 0 : i32
    %c0_i32_0 = arith.constant 0 : i32
    %c0_i32_1 = arith.constant 0 : i32
    return %c0_i32, %c0_i32_0 : i32, i32
  }
  func.func @transform_6(%arg0: i32) -> (i32, i32) {
    %c0_i32 = arith.constant 0 : i32
    %c0_i32_0 = arith.constant 0 : i32
    %c0_i32_1 = arith.constant 0 : i32
    return %c0_i32, %c0_i32_0 : i32, i32
  }
  func.func @transform_7(%arg0: i32) -> (i32, i32, i32) {
    %c0_i32 = arith.constant 0 : i32
    %c0_i32_0 = arith.constant 0 : i32
    %c0_i32_1 = arith.constant 0 : i32
    return %arg0, %c0_i32, %c0_i32_0 : i32, i32, i32
  }
}

</mosaic_0001>

<llo_original>
// kernel: tpu_custom_call.1
$region0: #{tpu_custom_call.1}
  #allocation0 [shape = 'u32[]', space=smem, size = 0x4, offset = 0x4, fixed_abs, tag = 'smem constant byte address 0x4 - core index']
  #allocation1 [shape = 'u32[72,128]{1,0:T(1,128)}', space=vmem, size = 0x9000, scoped, tag = 'internal scratch']
  %s0 = inlined_call_operand.vmem [shape: bf16[2,4,32,32], index: 0, kind: input, shape index: {}]
  %s1 = inlined_call_operand.vmem [shape: f32[2,32,16], index: 1, kind: input, shape index: {}]
  %s2 = inlined_call_operand.vmem [shape: f32[2,32,1], index: 2, kind: input, shape index: {}]
  %s3 = inlined_call_operand.vmem [shape: bf16[4,16,32], index: 3, kind: input, shape index: {}]
  %s4 = inlined_call_operand.hbm [shape: bf16[4,32,32], index: 4, kind: input, shape index: {}]
  %s5 = inlined_call_operand.hbm [shape: f32[4,32], index: 5, kind: input, shape index: {}]
  %s6 = inlined_call_operand.vmem [shape: f32[4,32], index: 6, kind: input, shape index: {}]
  %s7 = inlined_call_operand.hbm [shape: f32[2,32,32], index: 7, kind: output, shape index: {}]
  %s8 = sld [smem:[#allocation0]]
  $region69: #{tpu_custom_call.1} parent=0
    _
  %s10 = ssub.s32 1, %s8
  %s11 = scalar_select 0, %s10, %s8
  $region1: #{tpu_custom_call.1} parent=0
    #allocation2 [shape = 'u8[32768]{0}', space=vmem, size = 0x8000, scoped, tag = 'input window, operand 4, single buffered']
    #allocation3 [shape = 's32[2]{0}', space=sflag, size = 0x8, scoped, tag = 'scoped memory for tpu_custom_call.1']
    #allocation4 [shape = 's32[2]{0}', space=sflag, size = 0x8, scoped, tag = 'scoped memory for tpu_custom_call.1']
    #allocation5 [shape = 'u8[2048]{0}', space=vmem, size = 0x800, scoped, tag = 'input window, operand 5, single buffered']
    #allocation6 [shape = 's32[1]{0}', space=sflag, size = 0x4, scoped, tag = 'scoped memory for tpu_custom_call.1']
    #allocation7 [shape = 'u8[32768]{0}', space=vmem, size = 0x8000, scoped, tag = 'output window, operand 0']
    %12 = vsyncpa [#allocation3], 0
    %13 = vsyncpa [#allocation6], 0
    %14 = vsyncpa [#allocation4], 0
    %s15 = scalar_lea.sflag [#allocation4], 1
    %16 = vsyncpa %s15, 0
    loop: start=0, step=1, limit=4
    $region2: #{tpu_custom_call.1} parent=1 // loop_pre_header
      _
    $region3: #{tpu_custom_call.1} parent=1 // loop_header
      %s18 = sphi 0, %s22
      %p19 = scmp.ge.s32.totalorder %s18, 4
      %s28 = sphi 0, %s30
      %s31 = sphi 0, %s28
      %s32 = sphi 0, %s31
      %s48 = sphi 0, %s32
      %s54 = sphi 0, %s56
      %s57 = sphi 0, %s54
      %s58 = sphi 0, %s57
      %s74 = sphi 0, %s58
      %s80 = sphi 0, %s82
      %s83 = sphi 0, %s80
      %s84 = sphi 0, %s83
      %s100 = sphi 0, %s84
      %s104 = sphi 0, %s104
      %s106 = sphi 0, %s104
      %s107 = sphi 0, %s106
      %s121 = sphi 0, %s107
      %s125 = sphi 0, %s125
      %s127 = sphi 0, %s125
      %s128 = sphi 0, %s127
      %s142 = sphi 0, %s128
      %s146 = sphi 0, %s146
      %s148 = sphi 0, %s146
      %s149 = sphi 0, %s148
      %s163 = sphi 0, %s149
      %s167 = sphi 0, %s167
      %s169 = sphi 0, %s167
      %s170 = sphi 0, %s169
      %s184 = sphi 0, %s170
      %s190 = sphi 0, %s192
      %s193 = sphi 0, %s190
      %s194 = sphi 0, %s193
      %s210 = sphi 0, %s194
    $region4: #{tpu_custom_call.1} parent=1 // loop_header_branch
      %21 = sbr.rel (%p19) target = $region8
    $region5: #{tpu_custom_call.1} parent=1 // loop_body
      %s23 = ssub.s32 %s18, 1
      %s24 = ssub.s32 %s18, 2
      %s25 = sadd.s32 %s18, 1
      %s26 = ssub.s32 %s18, %s25
      %p27 = scmp.eq.s32.totalorder %s26, 0
      %s29 = sadd.s32 %s28, 1
      %s30 = scalar_select %p27, %s28, %s29
      %p33 = pneg %p27
      %p34 = scmp.eq.s32.totalorder %s18, 1
      %p35 = por %p33, %p34
      %p36 = scmp.ne.s32.totalorder %s28, %s31
      %p37 = scmp.eq.s32.totalorder %s18, 0
      %p38 = por %p36, %p37
      %p39 = scmp.ne.s32.totalorder %s28, %s31
      %p40 = scmp.eq.s32.totalorder %s23, 1
      %p41 = por %p39, %p40
      %p42 = scmp.ne.s32.totalorder %s31, %s32
      %p43 = scmp.eq.s32.totalorder %s23, 0
      %p44 = por %p42, %p43
      %p45 = scmp.ne.s32.totalorder %s31, %s32
      %p46 = scmp.eq.s32.totalorder %s24, 1
      %p47 = por %p45, %p46
      %p49 = scmp.ne.s32.totalorder %s32, %s48
      %p50 = scmp.eq.s32.totalorder %s24, 0
      %p51 = por %p49, %p50
      %s52 = ssub.s32 %s18, %s25
      %p53 = scmp.eq.s32.totalorder %s52, 0
      %s55 = sadd.s32 %s54, 1
      %s56 = scalar_select %p53, %s54, %s55
      %p59 = pneg %p53
      %p60 = scmp.eq.s32.totalorder %s18, 1
      %p61 = por %p59, %p60
      %p62 = scmp.ne.s32.totalorder %s54, %s57
      %p63 = scmp.eq.s32.totalorder %s18, 0
      %p64 = por %p62, %p63
      %p65 = scmp.ne.s32.totalorder %s54, %s57
      %p66 = scmp.eq.s32.totalorder %s23, 1
      %p67 = por %p65, %p66
      %p68 = scmp.ne.s32.totalorder %s57, %s58
      %p69 = scmp.eq.s32.totalorder %s23, 0
      %p70 = por %p68, %p69
      %p71 = scmp.ne.s32.totalorder %s57, %s58
      %p72 = scmp.eq.s32.totalorder %s24, 1
      %p73 = por %p71, %p72
      %p75 = scmp.ne.s32.totalorder %s58, %s74
      %p76 = scmp.eq.s32.totalorder %s24, 0
      %p77 = por %p75, %p76
      %s78 = ssub.s32 %s18, %s25
      %p79 = scmp.eq.s32.totalorder %s78, 0
      %s81 = sadd.s32 %s80, 1
      %s82 = scalar_select %p79, %s80, %s81
      %p85 = pneg %p79
      %p86 = scmp.eq.s32.totalorder %s18, 1
      %p87 = por %p85, %p86
      %p88 = scmp.ne.s32.totalorder %s80, %s83
      %p89 = scmp.eq.s32.totalorder %s18, 0
      %p90 = por %p88, %p89
      %p91 = scmp.ne.s32.totalorder %s80, %s83
      %p92 = scmp.eq.s32.totalorder %s23, 1
      %p93 = por %p91, %p92
      %p94 = scmp.ne.s32.totalorder %s83, %s84
      %p95 = scmp.eq.s32.totalorder %s23, 0
      %p96 = por %p94, %p95
      %p97 = scmp.ne.s32.totalorder %s83, %s84
      %p98 = scmp.eq.s32.totalorder %s24, 1
      %p99 = por %p97, %p98
      %p101 = scmp.ne.s32.totalorder %s84, %s100
      %p102 = scmp.eq.s32.totalorder %s24, 0
      %p103 = por %p101, %p102
      %s105 = sadd.s32 %s104, 1
      %p108 = scmp.eq.s32.totalorder %s18, 1
      %p109 = scmp.ne.s32.totalorder %s104, %s106
      %p110 = scmp.eq.s32.totalorder %s18, 0
      %p111 = por %p109, %p110
      %p112 = scmp.ne.s32.totalorder %s104, %s106
      %p113 = scmp.eq.s32.totalorder %s23, 1
      %p114 = por %p112, %p113
      %p115 = scmp.ne.s32.totalorder %s106, %s107
      %p116 = scmp.eq.s32.totalorder %s23, 0
      %p117 = por %p115, %p116
      %p118 = scmp.ne.s32.totalorder %s106, %s107
      %p119 = scmp.eq.s32.totalorder %s24, 1
      %p120 = por %p118, %p119
      %p122 = scmp.ne.s32.totalorder %s107, %s121
      %p123 = scmp.eq.s32.totalorder %s24, 0
      %p124 = por %p122, %p123
      %s126 = sadd.s32 %s125, 1
      %p129 = scmp.eq.s32.totalorder %s18, 1
      %p130 = scmp.ne.s32.totalorder %s125, %s127
      %p131 = scmp.eq.s32.totalorder %s18, 0
      %p132 = por %p130, %p131
      %p133 = scmp.ne.s32.totalorder %s125, %s127
      %p134 = scmp.eq.s32.totalorder %s23, 1
      %p135 = por %p133, %p134
      %p136 = scmp.ne.s32.totalorder %s127, %s128
      %p137 = scmp.eq.s32.totalorder %s23, 0
      %p138 = por %p136, %p137
      %p139 = scmp.ne.s32.totalorder %s127, %s128
      %p140 = scmp.eq.s32.totalorder %s24, 1
      %p141 = por %p139, %p140
      %p143 = scmp.ne.s32.totalorder %s128, %s142
      %p144 = scmp.eq.s32.totalorder %s24, 0
      %p145 = por %p143, %p144
      %s147 = sadd.s32 %s146, 1
      %p150 = scmp.eq.s32.totalorder %s18, 1
      %p151 = scmp.ne.s32.totalorder %s146, %s148
      %p152 = scmp.eq.s32.totalorder %s18, 0
      %p153 = por %p151, %p152
      %p154 = scmp.ne.s32.totalorder %s146, %s148
      %p155 = scmp.eq.s32.totalorder %s23, 1
      %p156 = por %p154, %p155
      %p157 = scmp.ne.s32.totalorder %s148, %s149
      %p158 = scmp.eq.s32.totalorder %s23, 0
      %p159 = por %p157, %p158
      %p160 = scmp.ne.s32.totalorder %s148, %s149
      %p161 = scmp.eq.s32.totalorder %s24, 1
      %p162 = por %p160, %p161
      %p164 = scmp.ne.s32.totalorder %s149, %s163
      %p165 = scmp.eq.s32.totalorder %s24, 0
      %p166 = por %p164, %p165
      %s168 = sadd.s32 %s167, 1
      %p171 = scmp.eq.s32.totalorder %s18, 1
      %p172 = scmp.ne.s32.totalorder %s167, %s169
      %p173 = scmp.eq.s32.totalorder %s18, 0
      %p174 = por %p172, %p173
      %p175 = scmp.ne.s32.totalorder %s167, %s169
      %p176 = scmp.eq.s32.totalorder %s23, 1
      %p177 = por %p175, %p176
      %p178 = scmp.ne.s32.totalorder %s169, %s170
      %p179 = scmp.eq.s32.totalorder %s23, 0
      %p180 = por %p178, %p179
      %p181 = scmp.ne.s32.totalorder %s169, %s170
      %p182 = scmp.eq.s32.totalorder %s24, 1
      %p183 = por %p181, %p182
      %p185 = scmp.ne.s32.totalorder %s170, %s184
      %p186 = scmp.eq.s32.totalorder %s24, 0
      %p187 = por %p185, %p186
      %s188 = ssub.s32 %s18, %s25
      %p189 = scmp.eq.s32.totalorder %s188, 0
      %s191 = sadd.s32 %s190, 1
      %s192 = scalar_select %p189, %s190, %s191
      %p195 = pneg %p189
      %p196 = scmp.eq.s32.totalorder %s18, 1
      %p197 = por %p195, %p196
      %p198 = scmp.ne.s32.totalorder %s190, %s193
      %p199 = scmp.eq.s32.totalorder %s18, 0
      %p200 = por %p198, %p199
      %p201 = scmp.ne.s32.totalorder %s190, %s193
      %p202 = scmp.eq.s32.totalorder %s23, 1
      %p203 = por %p201, %p202
      %p204 = scmp.ne.s32.totalorder %s193, %s194
      %p205 = scmp.eq.s32.totalorder %s23, 0
      %p206 = por %p204, %p205
      %p207 = scmp.ne.s32.totalorder %s193, %s194
      %p208 = scmp.eq.s32.totalorder %s24, 1
      %p209 = por %p207, %p208
      %p211 = scmp.ne.s32.totalorder %s194, %s210
      %p212 = scmp.eq.s32.totalorder %s24, 0
      %p213 = por %p211, %p212
      %p214 = scmp.le.s32.totalorder 1, %s18
      %p215 = scmp.lt.s32.totalorder %s18, 3
      %p216 = pnand %p214, %p215
      %p217 = pneg %p216
      // Predicated region
      $region9: #{tpu_custom_call.1} parent=5 // pred_check
        _
      $region10: #{tpu_custom_call.1} parent=5 // pred_check_branch
        %219 = sbr.rel (%p216) target = $region12
      $region11: #{tpu_custom_call.1} parent=5 // pred_region
        %s220 = ssub.s32 %s18, 1
        // Predicated region
        $region13: #{tpu_custom_call.1} parent=11 // pred_check
          %p221 = pneg %p117
        $region14: #{tpu_custom_call.1} parent=11 // pred_check_branch
          %223 = sbr.rel (%p221) target = $region16
        $region15: #{tpu_custom_call.1} parent=11 // pred_region
          _
        $region16: #{tpu_custom_call.1} parent=11 // pred_fallthru
          _
        // Predicated region
        $region17: #{tpu_custom_call.1} parent=11 // pred_check
          %p224 = pneg %p138
        $region18: #{tpu_custom_call.1} parent=11 // pred_check_branch
          %226 = sbr.rel (%p224) target = $region20
        $region19: #{tpu_custom_call.1} parent=11 // pred_region
          %228 = vsyncadd [#allocation3], 0
          %s229 = sshll.u32 %s4, 4
          %s230 = int_to_ptr.hbm [resolvable:$true] %s229
          %s231 = sshll.u32 [#allocation2], 4
          %s232 = int_to_ptr.vmem [resolvable:$true] %s231
          %237 = dma.hbm_to_vmem [thread:$0]  %s230, 1024, %s232, [#allocation3], 64, 64, 4
        $region20: #{tpu_custom_call.1} parent=11 // pred_fallthru
          _
        // Predicated region
        $region21: #{tpu_custom_call.1} parent=11 // pred_check
          %p238 = pneg %p159
        $region22: #{tpu_custom_call.1} parent=11 // pred_check_branch
          %240 = sbr.rel (%p238) target = $region24
        $region23: #{tpu_custom_call.1} parent=11 // pred_region
          %242 = vsyncadd [#allocation6], 0
          %s244 = sshll.u32 %s5, 4
          %s245 = int_to_ptr.hbm [resolvable:$true] %s244
          %s246 = sshll.u32 [#allocation5], 4
          %s247 = int_to_ptr.vmem [resolvable:$true] %s246
          %249 = dma.hbm_to_vmem [thread:$0]  %s245, 64, %s247, [#allocation6]
        $region24: #{tpu_custom_call.1} parent=11 // pred_fallthru
          _
        // Predicated region
        $region25: #{tpu_custom_call.1} parent=11 // pred_check
          %p250 = pneg %p180
        $region26: #{tpu_custom_call.1} parent=11 // pred_check_branch
          %252 = sbr.rel (%p250) target = $region28
        $region27: #{tpu_custom_call.1} parent=11 // pred_region
          _
        $region28: #{tpu_custom_call.1} parent=11 // pred_fallthru
          _
      $region12: #{tpu_custom_call.1} parent=5 // pred_fallthru
        _
      %p253 = scmp.lt.s32.totalorder %s18, 2
      // Predicated region
      $region29: #{tpu_custom_call.1} parent=5 // pred_check
        %p254 = pneg %p253
      $region30: #{tpu_custom_call.1} parent=5 // pred_check_branch
        %256 = sbr.rel (%p254) target = $region32
      $region31: #{tpu_custom_call.1} parent=5 // pred_region
        // Predicated region
        $region33: #{tpu_custom_call.1} parent=31 // pred_check
          %p257 = pneg %p38
        $region34: #{tpu_custom_call.1} parent=31 // pred_check_branch
          %259 = sbr.rel (%p257) target = $region36
        $region35: #{tpu_custom_call.1} parent=31 // pred_region
          %p260 = scmp.lt.s32.totalorder %s18, 1
          %s261 = scalar_select %p260, %s18, 1
          %s262 = smul.addr %s261, 16
          %s263 = smul.addr %s262, 4
          %s264 = scalar_lea.vmem %s0, %s263
        $region36: #{tpu_custom_call.1} parent=31 // pred_fallthru
          _
        // Predicated region
        $region37: #{tpu_custom_call.1} parent=31 // pred_check
          %p265 = pneg %p64
        $region38: #{tpu_custom_call.1} parent=31 // pred_check_branch
          %267 = sbr.rel (%p265) target = $region40
        $region39: #{tpu_custom_call.1} parent=31 // pred_region
          %p268 = scmp.lt.s32.totalorder %s18, 1
          %s269 = scalar_select %p268, %s18, 1
          %s270 = smul.addr %s269, 4
          %s271 = smul.addr %s270, 8
          %s272 = scalar_lea.vmem %s1, %s271
        $region40: #{tpu_custom_call.1} parent=31 // pred_fallthru
          _
        // Predicated region
        $region41: #{tpu_custom_call.1} parent=31 // pred_check
          %p273 = pneg %p90
        $region42: #{tpu_custom_call.1} parent=31 // pred_check_branch
          %275 = sbr.rel (%p273) target = $region44
        $region43: #{tpu_custom_call.1} parent=31 // pred_region
          %p276 = scmp.lt.s32.totalorder %s18, 1
          %s277 = scalar_select %p276, %s18, 1
          %s278 = smul.addr %s277, 4
          %s279 = smul.addr %s278, 8
          %s280 = scalar_lea.vmem %s2, %s279
        $region44: #{tpu_custom_call.1} parent=31 // pred_fallthru
          _
      $region32: #{tpu_custom_call.1} parent=5 // pred_fallthru
        _
      %p281 = scmp.le.s32.totalorder 1, %s18
      %p282 = scmp.lt.s32.totalorder %s18, 3
      %p283 = pnand %p281, %p282
      %p284 = pneg %p283
      // Predicated region
      $region45: #{tpu_custom_call.1} parent=5 // pred_check
        _
      $region46: #{tpu_custom_call.1} parent=5 // pred_check_branch
        %286 = sbr.rel (%p283) target = $region48
      $region47: #{tpu_custom_call.1} parent=5 // pred_region
        %s287 = ssub.s32 %s18, 1
        // Predicated region
        $region49: #{tpu_custom_call.1} parent=47 // pred_check
          %p288 = pneg %p138
        $region50: #{tpu_custom_call.1} parent=47 // pred_check_branch
          %290 = sbr.rel (%p288) target = $region52
        $region51: #{tpu_custom_call.1} parent=47 // pred_region
          %292 = dma.done [#allocation3], 1024
        $region52: #{tpu_custom_call.1} parent=47 // pred_fallthru
          _
        // Predicated region
        $region53: #{tpu_custom_call.1} parent=47 // pred_check
          %p293 = pneg %p159
        $region54: #{tpu_custom_call.1} parent=47 // pred_check_branch
          %295 = sbr.rel (%p293) target = $region56
        $region55: #{tpu_custom_call.1} parent=47 // pred_region
          %297 = dma.done [#allocation6], 64
        $region56: #{tpu_custom_call.1} parent=47 // pred_fallthru
          _
        %p298 = scmp.lt.s32.totalorder %s23, 1
        %s299 = scalar_select %p298, %s23, 1
        %s300 = smul.addr %s299, 16
        %s301 = smul.addr %s300, 4
        %s302 = scalar_lea.vmem %s0, %s301
        %p303 = pneg %p44
        %p304 = pneg %p41
        %p305 = scmp.lt.s32.totalorder %s23, 1
        %s306 = scalar_select %p305, %s23, 1
        %s307 = smul.addr %s306, 4
        %s308 = smul.addr %s307, 8
        %s309 = scalar_lea.vmem %s1, %s308
        %p310 = pneg %p70
        %p311 = pneg %p67
        %p312 = scmp.lt.s32.totalorder %s23, 1
        %s313 = scalar_select %p312, %s23, 1
        %s314 = smul.addr %s313, 4
        %s315 = smul.addr %s314, 8
        %s316 = scalar_lea.vmem %s2, %s315
        %p317 = pneg %p96
        %p318 = pneg %p93
        %p319 = pneg %p117
        %p320 = pneg %p114
        %p321 = pneg %p138
        %p322 = pneg %p135
        %p323 = pneg %p159
        %p324 = pneg %p156
        %p325 = pneg %p180
        %p326 = pneg %p177
        %p327 = pneg %p206
        %p328 = pneg %p203
        %s329 = sand.u32 %s193, 1
        %s330 = scalar_lea.sflag [#allocation4], %s329
        %s331 = sand.u32 %s193, 1
        %s332 = smul.addr %s331, 32
        %s333 = scalar_lea.vmem [#allocation7], %s332
        %p334 = scmp.lt.s32.totalorder %s23, 1
        %s335 = scalar_select %p334, %s23, 1
        %s336 = smul.addr %s335, 16
        %s337 = smul.addr %s336, 4
        %s338 = scalar_lea.vmem %s0, %s337
        %p339 = scmp.lt.s32.totalorder %s23, 1
        %s340 = scalar_select %p339, %s23, 1
        %s341 = smul.addr %s340, 4
        %s342 = smul.addr %s341, 8
        %s343 = scalar_lea.vmem %s1, %s342
        %p344 = scmp.lt.s32.totalorder %s23, 1
        %s345 = scalar_select %p344, %s23, 1
        %s346 = smul.addr %s345, 4
        %s347 = smul.addr %s346, 8
        %s348 = scalar_lea.vmem %s2, %s347
        %v350 = vld [vmem:[%s338] sm:$0xf]
        %v351 = vld [vmem:[%s338 + $0x4] sm:$0xf]
        %v352 = vld [vmem:[%s338 + $0x8] sm:$0xf]
        %v353 = vld [vmem:[%s338 + $0xc] sm:$0xf]
        %v354 = vld [vmem:[%s338 + $0x10] sm:$0xf]
        %v355 = vld [vmem:[%s338 + $0x14] sm:$0xf]
        %v356 = vld [vmem:[%s338 + $0x18] sm:$0xf]
        %v357 = vld [vmem:[%s338 + $0x1c] sm:$0xf]
        %v358 = vld [vmem:[%s338 + $0x20] sm:$0xf]
        %v359 = vld [vmem:[%s338 + $0x24] sm:$0xf]
        %v360 = vld [vmem:[%s338 + $0x28] sm:$0xf]
        %v361 = vld [vmem:[%s338 + $0x2c] sm:$0xf]
        %v362 = vld [vmem:[%s338 + $0x30] sm:$0xf]
        %v363 = vld [vmem:[%s338 + $0x34] sm:$0xf]
        %v364 = vld [vmem:[%s338 + $0x38] sm:$0xf]
        %v365 = vld [vmem:[%s338 + $0x3c] sm:$0xf]
        %v366 = vunpack.c.l.bf16 %v350
        %v367 = vunpack.c.l.bf16 %v351
        %v368 = vunpack.c.l.bf16 %v352
        %v369 = vunpack.c.l.bf16 %v353
        %v370 = vunpack.c.l.bf16 %v354
        %v371 = vunpack.c.l.bf16 %v355
        %v372 = vunpack.c.l.bf16 %v356
        %v373 = vunpack.c.l.bf16 %v357
        %v374 = vunpack.c.l.bf16 %v358
        %v375 = vunpack.c.l.bf16 %v359
        %v376 = vunpack.c.l.bf16 %v360
        %v377 = vunpack.c.l.bf16 %v361
        %v378 = vunpack.c.l.bf16 %v362
        %v379 = vunpack.c.l.bf16 %v363
        %v380 = vunpack.c.l.bf16 %v364
        %v381 = vunpack.c.l.bf16 %v365
        %vm382 = vcmask 261120
        %v383 = vsel %vm382, %v366, 0.0
        %384 = vadd.xlane.f32.xlu0 %v383
        %v385 = vpop.xlane.xlu0 %384
        %v386 = vsel %vm382, %v367, 0.0
        %387 = vadd.xlane.f32.xlu0 %v386
        %v388 = vpop.xlane.xlu0 %387
        %v389 = vsel %vm382, %v368, 0.0
        %390 = vadd.xlane.f32.xlu0 %v389
        %v391 = vpop.xlane.xlu0 %390
        %v392 = vsel %vm382, %v369, 0.0
        %393 = vadd.xlane.f32.xlu0 %v392
        %v394 = vpop.xlane.xlu0 %393
        %v395 = vsel %vm382, %v370, 0.0
        %396 = vadd.xlane.f32.xlu0 %v395
        %v397 = vpop.xlane.xlu0 %396
        %v398 = vsel %vm382, %v371, 0.0
        %399 = vadd.xlane.f32.xlu0 %v398
        %v400 = vpop.xlane.xlu0 %399
        %v401 = vsel %vm382, %v372, 0.0
        %402 = vadd.xlane.f32.xlu0 %v401
        %v403 = vpop.xlane.xlu0 %402
        %v404 = vsel %vm382, %v373, 0.0
        %405 = vadd.xlane.f32.xlu0 %v404
        %v406 = vpop.xlane.xlu0 %405
        %v407 = vsel %vm382, %v374, 0.0
        %408 = vadd.xlane.f32.xlu0 %v407
        %v409 = vpop.xlane.xlu0 %408
        %v410 = vsel %vm382, %v375, 0.0
        %411 = vadd.xlane.f32.xlu0 %v410
        %v412 = vpop.xlane.xlu0 %411
        %v413 = vsel %vm382, %v376, 0.0
        %414 = vadd.xlane.f32.xlu0 %v413
        %v415 = vpop.xlane.xlu0 %414
        %v416 = vsel %vm382, %v377, 0.0
        %417 = vadd.xlane.f32.xlu0 %v416
        %v418 = vpop.xlane.xlu0 %417
        %v419 = vsel %vm382, %v378, 0.0
        %420 = vadd.xlane.f32.xlu0 %v419
        %v421 = vpop.xlane.xlu0 %420
        %v422 = vsel %vm382, %v379, 0.0
        %423 = vadd.xlane.f32.xlu0 %v422
        %v424 = vpop.xlane.xlu0 %423
        %v425 = vsel %vm382, %v380, 0.0
        %426 = vadd.xlane.f32.xlu0 %v425
        %v427 = vpop.xlane.xlu0 %426
        %v428 = vsel %vm382, %v381, 0.0
        %429 = vadd.xlane.f32.xlu0 %v428
        %v430 = vpop.xlane.xlu0 %429
        %v431 = vld [vmem:[%s348] sm:$0xff]
        %v432 = vld [vmem:[%s348 + $0x8] sm:$0xff]
        %v433 = vld [vmem:[%s348 + $0x10] sm:$0xff]
        %v434 = vld [vmem:[%s348 + $0x18] sm:$0xff]
        %v435 = vadd.f32 %v431, 1e-05
        %v436 = vadd.f32 %v432, 1e-05
        %v437 = vadd.f32 %v433, 1e-05
        %v438 = vadd.f32 %v434, 1e-05
        %vm439 = vcmask 7168
        %v440 = vsel %vm439, %v435, 0.0
        %v441 = vsel %vm439, %v436, 0.0
        %v442 = vadd.f32 %v440, %v441
        %v443 = vsel %vm439, %v437, 0.0
        %v444 = vadd.f32 %v442, %v443
        %v445 = vsel %vm439, %v438, 0.0
        %v446 = vadd.f32 %v444, %v445
        %v447 = vrot.slane %v446, 4
        %v448 = vadd.f32 %v446, %v447
        %v449 = vrot.slane %v448, 2
        %v450 = vadd.f32 %v448, %v449
        %v451 = vrot.slane %v450, 1
        %v452 = vadd.f32 %v450, %v451
        %v453 = vadd.f32 %v452, 1e-05
        %v454 = vrcp.pop %v453
        %v455 = vld [vmem:[%s343] sm:$0xff]
        %v456 = vld [vmem:[%s343 + $0x8] sm:$0xff]
        %v457 = vld [vmem:[%s343 + $0x10] sm:$0xff]
        %v458 = vld [vmem:[%s343 + $0x18] sm:$0xff]
        %v459 = vld [vmem:[%s3] sm:$0xf]
        %v460 = vld [vmem:[%s3 + $0x4] sm:$0xf]
        %v461 = vld [vmem:[%s3 + $0x8] sm:$0xf]
        %v462 = vld [vmem:[%s3 + $0xc] sm:$0xf]
        %v463 = vld [vmem:[%s3 + $0x10] sm:$0xf]
        %v464 = vld [vmem:[%s3 + $0x14] sm:$0xf]
        %v465 = vld [vmem:[%s3 + $0x18] sm:$0xf]
        %v466 = vld [vmem:[%s3 + $0x1c] sm:$0xf]
        %v467 = vld [vmem:[#allocation5] sm:$0xf]
        %v468 = vpack.c.bf16 %v455, %v455
        %v469 = vpack.c.bf16 %v456, %v456
        %v470 = vpack.c.bf16 %v457, %v457
        %v471 = vpack.c.bf16 %v458, %v458
        %v488 = vunpack.c.l.b16 %v350
        %v489 = vunpack.c.l.b16 %v351
        %v490 = vunpack.c.l.b16 %v352
        %v491 = vunpack.c.l.b16 %v353
        %v492 = vunpack.c.l.b16 %v354
        %v493 = vunpack.c.l.b16 %v355
        %v494 = vunpack.c.l.b16 %v356
        %v495 = vunpack.c.l.b16 %v357
        %v496 = vunpack.c.l.b16 %v358
        %v497 = vunpack.c.l.b16 %v359
        %v498 = vunpack.c.l.b16 %v360
        %v499 = vunpack.c.l.b16 %v361
        %v500 = vunpack.c.l.b16 %v362
        %v501 = vunpack.c.l.b16 %v363
        %v502 = vunpack.c.l.b16 %v364
        %v503 = vunpack.c.l.b16 %v365
        %v504 = vpack.c.b16 %v489, %v488
        %v505 = vpack.c.b16 %v491, %v490
        %v506 = vpack.c.b16 %v493, %v492
        %v507 = vpack.c.b16 %v495, %v494
        %v508 = vpack.c.b16 %v497, %v496
        %v509 = vpack.c.b16 %v499, %v498
        %v510 = vpack.c.b16 %v501, %v500
        %v511 = vpack.c.b16 %v503, %v502
        %v516 = vunpack.c.l.b16 %v468
        %v517 = vunpack.c.l.b16 %v469
        %v518 = vunpack.c.l.b16 %v470
        %v519 = vunpack.c.l.b16 %v471
        %v520 = vpack.c.b16 %v517, %v516
        %v521 = vpack.c.b16 %v519, %v518
        %v525 = vsel %vm382, %v504, 0
        %v528 = vsel %vm382, %v505, 0
        %v531 = vsel %vm382, %v506, 0
        %v534 = vsel %vm382, %v507, 0
        %v537 = vsel %vm382, %v508, 0
        %v540 = vsel %vm382, %v509, 0
        %v543 = vsel %vm382, %v510, 0
        %v546 = vsel %vm382, %v511, 0
        %548 = vmatpush.bf16.msra.mxu0 0
        %549 = vmatpush.bf16.msra.mxu0 0
        %550 = vmatpush.bf16.msra.mxu0 0
        %551 = vmatpush.bf16.msra.mxu0 0
        %552 = vmatpush.bf16.msra.mxu0 0
        %553 = vmatpush.bf16.msra.mxu0 0
        %554 = vmatpush.bf16.msra.mxu0 %v521
        %555 = vmatpush.bf16.msra.mxu0 %v520
        %556 = vmatmul.bf16.gmra.mxu0 %v525
        %v557 = vpop.f32.mrf.mxu0
        %v558 = vadd.f32 0.0, %v557
        %v559 = vpop.f32.mrf.mxu0
        %v560 = vadd.f32 0.0, %v559
        %561 = vmatmul.bf16.gmra.mxu0 %v528
        %v562 = vpop.f32.mrf.mxu0
        %v563 = vadd.f32 0.0, %v562
        %v564 = vpop.f32.mrf.mxu0
        %v565 = vadd.f32 0.0, %v564
        %566 = vmatmul.bf16.gmra.mxu0 %v531
        %v567 = vpop.f32.mrf.mxu0
        %v568 = vadd.f32 0.0, %v567
        %v569 = vpop.f32.mrf.mxu0
        %v570 = vadd.f32 0.0, %v569
        %571 = vmatmul.bf16.gmra.mxu0 %v534
        %v572 = vpop.f32.mrf.mxu0
        %v573 = vadd.f32 0.0, %v572
        %v574 = vpop.f32.mrf.mxu0
        %v575 = vadd.f32 0.0, %v574
        %576 = vmatmul.bf16.gmra.mxu0 %v537
        %v577 = vpop.f32.mrf.mxu0
        %v578 = vadd.f32 0.0, %v577
        %v579 = vpop.f32.mrf.mxu0
        %v580 = vadd.f32 0.0, %v579
        %581 = vmatmul.bf16.gmra.mxu0 %v540
        %v582 = vpop.f32.mrf.mxu0
        %v583 = vadd.f32 0.0, %v582
        %v584 = vpop.f32.mrf.mxu0
        %v585 = vadd.f32 0.0, %v584
        %586 = vmatmul.bf16.gmra.mxu0 %v543
        %v587 = vpop.f32.mrf.mxu0
        %v588 = vadd.f32 0.0, %v587
        %v589 = vpop.f32.mrf.mxu0
        %v590 = vadd.f32 0.0, %v589
        %591 = vmatmul.bf16.gmra.mxu0 %v546
        %v592 = vpop.f32.mrf.mxu0
        %v593 = vadd.f32 0.0, %v592
        %v594 = vpop.f32.mrf.mxu0
        %v595 = vadd.f32 0.0, %v594
        %596 = vdwg.mxu0
        %v597 = vpack.c.bf16 %v558, %v558
        %v598 = vpack.c.bf16 %v560, %v560
        %v599 = vpack.c.bf16 %v563, %v563
        %v600 = vpack.c.bf16 %v565, %v565
        %v601 = vpack.c.bf16 %v568, %v568
        %v602 = vpack.c.bf16 %v570, %v570
        %v603 = vpack.c.bf16 %v573, %v573
        %v604 = vpack.c.bf16 %v575, %v575
        %v605 = vpack.c.bf16 %v578, %v578
        %v606 = vpack.c.bf16 %v580, %v580
        %v607 = vpack.c.bf16 %v583, %v583
        %v608 = vpack.c.bf16 %v585, %v585
        %v609 = vpack.c.bf16 %v588, %v588
        %v610 = vpack.c.bf16 %v590, %v590
        %v611 = vpack.c.bf16 %v593, %v593
        %v612 = vpack.c.bf16 %v595, %v595
        %v617 = vunpack.c.l.b16 %v597
        %v618 = vunpack.c.l.b16 %v598
        %v619 = vunpack.c.l.b16 %v599
        %v620 = vunpack.c.l.b16 %v600
        %v621 = vpack.c.b16 %v618, %v617
        %v622 = vpack.c.b16 %v620, %v619
        %v625 = vunpack.c.l.b16 %v459
        %v626 = vunpack.c.l.b16 %v460
        %v627 = vpack.c.b16 %v626, %v625
        %vm629 = vcmask 130048
        %v631 = vsel %vm629, %v621, 0
        %v634 = vsel %vm629, %v622, 0
        %636 = vmatpush.bf16.msra.mxu0 0
        %637 = vmatpush.bf16.msra.mxu0 0
        %638 = vmatpush.bf16.msra.mxu0 0
        %639 = vmatpush.bf16.msra.mxu0 0
        %640 = vmatpush.bf16.msra.mxu0 0
        %641 = vmatpush.bf16.msra.mxu0 0
        %642 = vmatpush.bf16.msra.mxu0 0
        %643 = vmatpush.bf16.msra.mxu0 %v627
        %644 = vmatmul.bf16.gmra.mxu0 %v631
        %v645 = vpop.f32.mrf.mxu0
        %v646 = vadd.f32 0.0, %v645
        %v647 = vpop.f32.mrf.mxu0
        %v648 = vadd.f32 0.0, %v647
        %649 = vmatmul.bf16.gmra.mxu0 %v634
        %v650 = vpop.f32.mrf.mxu0
        %v651 = vadd.f32 0.0, %v650
        %v652 = vpop.f32.mrf.mxu0
        %v653 = vadd.f32 0.0, %v652
        %654 = vdwg.mxu0
        %v655 = vperm.slane %v467, 0
        %v656 = vmul.f32 %v385, %v655
        %v657 = vmul.f32 %v388, %v655
        %v658 = vmul.f32 %v391, %v655
        %v659 = vmul.f32 %v394, %v655
        %v660 = vadd.f32 %v646, %v656
        %v661 = vadd.f32 %v648, %v657
        %v662 = vadd.f32 %v651, %v658
        %v663 = vadd.f32 %v653, %v659
        %v664 = vmax.f32 %v660, 0.0
        %v665 = vmax.f32 %v661, 0.0
        %v666 = vmax.f32 %v662, 0.0
        %v667 = vmax.f32 %v663, 0.0
        %v672 = vunpack.c.l.b16 %v601
        %v673 = vunpack.c.l.b16 %v602
        %v674 = vunpack.c.l.b16 %v603
        %v675 = vunpack.c.l.b16 %v604
        %v676 = vpack.c.b16 %v673, %v672
        %v677 = vpack.c.b16 %v675, %v674
        %v680 = vunpack.c.l.b16 %v461
        %v681 = vunpack.c.l.b16 %v462
        %v682 = vpack.c.b16 %v681, %v680
        %v685 = vsel %vm629, %v676, 0
        %v688 = vsel %vm629, %v677, 0
        %690 = vmatpush.bf16.msra.mxu0 0
        %691 = vmatpush.bf16.msra.mxu0 0
        %692 = vmatpush.bf16.msra.mxu0 0
        %693 = vmatpush.bf16.msra.mxu0 0
        %694 = vmatpush.bf16.msra.mxu0 0
        %695 = vmatpush.bf16.msra.mxu0 0
        %696 = vmatpush.bf16.msra.mxu0 0
        %697 = vmatpush.bf16.msra.mxu0 %v682
        %698 = vmatmul.bf16.gmra.mxu0 %v685
        %v699 = vpop.f32.mrf.mxu0
        %v700 = vadd.f32 0.0, %v699
        %v701 = vpop.f32.mrf.mxu0
        %v702 = vadd.f32 0.0, %v701
        %703 = vmatmul.bf16.gmra.mxu0 %v688
        %v704 = vpop.f32.mrf.mxu0
        %v705 = vadd.f32 0.0, %v704
        %v706 = vpop.f32.mrf.mxu0
        %v707 = vadd.f32 0.0, %v706
        %708 = vdwg.mxu0
        %v709 = vperm.slane %v467, 1
        %v710 = vmul.f32 %v397, %v709
        %v711 = vmul.f32 %v400, %v709
        %v712 = vmul.f32 %v403, %v709
        %v713 = vmul.f32 %v406, %v709
        %v714 = vadd.f32 %v700, %v710
        %v715 = vadd.f32 %v702, %v711
        %v716 = vadd.f32 %v705, %v712
        %v717 = vadd.f32 %v707, %v713
        %v718 = vmax.f32 %v714, 0.0
        %v719 = vmax.f32 %v715, 0.0
        %v720 = vmax.f32 %v716, 0.0
        %v721 = vmax.f32 %v717, 0.0
        %v722 = vmax.f32 %v664, %v718
        %v723 = vmax.f32 %v665, %v719
        %v724 = vmax.f32 %v666, %v720
        %v725 = vmax.f32 %v667, %v721
        %v730 = vunpack.c.l.b16 %v605
        %v731 = vunpack.c.l.b16 %v606
        %v732 = vunpack.c.l.b16 %v607
        %v733 = vunpack.c.l.b16 %v608
        %v734 = vpack.c.b16 %v731, %v730
        %v735 = vpack.c.b16 %v733, %v732
        %v738 = vunpack.c.l.b16 %v463
        %v739 = vunpack.c.l.b16 %v464
        %v740 = vpack.c.b16 %v739, %v738
        %v743 = vsel %vm629, %v734, 0
        %v746 = vsel %vm629, %v735, 0
        %748 = vmatpush.bf16.msra.mxu0 0
        %749 = vmatpush.bf16.msra.mxu0 0
        %750 = vmatpush.bf16.msra.mxu0 0
        %751 = vmatpush.bf16.msra.mxu0 0
        %752 = vmatpush.bf16.msra.mxu0 0
        %753 = vmatpush.bf16.msra.mxu0 0
        %754 = vmatpush.bf16.msra.mxu0 0
        %755 = vmatpush.bf16.msra.mxu0 %v740
        %756 = vmatmul.bf16.gmra.mxu0 %v743
        %v757 = vpop.f32.mrf.mxu0
        %v758 = vadd.f32 0.0, %v757
        %v759 = vpop.f32.mrf.mxu0
        %v760 = vadd.f32 0.0, %v759
        %761 = vmatmul.bf16.gmra.mxu0 %v746
        %v762 = vpop.f32.mrf.mxu0
        %v763 = vadd.f32 0.0, %v762
        %v764 = vpop.f32.mrf.mxu0
        %v765 = vadd.f32 0.0, %v764
        %766 = vdwg.mxu0
        %v767 = vperm.slane %v467, 2
        %v768 = vmul.f32 %v409, %v767
        %v769 = vmul.f32 %v412, %v767
        %v770 = vmul.f32 %v415, %v767
        %v771 = vmul.f32 %v418, %v767
        %v772 = vadd.f32 %v758, %v768
        %v773 = vadd.f32 %v760, %v769
        %v774 = vadd.f32 %v763, %v770
        %v775 = vadd.f32 %v765, %v771
        %v776 = vmax.f32 %v772, 0.0
        %v777 = vmax.f32 %v773, 0.0
        %v778 = vmax.f32 %v774, 0.0
        %v779 = vmax.f32 %v775, 0.0
        %v780 = vmax.f32 %v722, %v776
        %v781 = vmax.f32 %v723, %v777
        %v782 = vmax.f32 %v724, %v778
        %v783 = vmax.f32 %v725, %v779
        %v788 = vunpack.c.l.b16 %v609
        %v789 = vunpack.c.l.b16 %v610
        %v790 = vunpack.c.l.b16 %v611
        %v791 = vunpack.c.l.b16 %v612
        %v792 = vpack.c.b16 %v789, %v788
        %v793 = vpack.c.b16 %v791, %v790
        %v796 = vunpack.c.l.b16 %v465
        %v797 = vunpack.c.l.b16 %v466
        %v798 = vpack.c.b16 %v797, %v796
        %v801 = vsel %vm629, %v792, 0
        %v804 = vsel %vm629, %v793, 0
        %806 = vmatpush.bf16.msra.mxu0 0
        %807 = vmatpush.bf16.msra.mxu0 0
        %808 = vmatpush.bf16.msra.mxu0 0
        %809 = vmatpush.bf16.msra.mxu0 0
        %810 = vmatpush.bf16.msra.mxu0 0
        %811 = vmatpush.bf16.msra.mxu0 0
        %812 = vmatpush.bf16.msra.mxu0 0
        %813 = vmatpush.bf16.msra.mxu0 %v798
        %814 = vmatmul.bf16.gmra.mxu0 %v801
        %v815 = vpop.f32.mrf.mxu0
        %v816 = vadd.f32 0.0, %v815
        %v817 = vpop.f32.mrf.mxu0
        %v818 = vadd.f32 0.0, %v817
        %819 = vmatmul.bf16.gmra.mxu0 %v804
        %v820 = vpop.f32.mrf.mxu0
        %v821 = vadd.f32 0.0, %v820
        %v822 = vpop.f32.mrf.mxu0
        %v823 = vadd.f32 0.0, %v822
        %824 = vdwg.mxu0
        %v825 = vperm.slane %v467, 3
        %v826 = vmul.f32 %v421, %v825
        %v827 = vmul.f32 %v424, %v825
        %v828 = vmul.f32 %v427, %v825
        %v829 = vmul.f32 %v430, %v825
        %v830 = vadd.f32 %v816, %v826
        %v831 = vadd.f32 %v818, %v827
        %v832 = vadd.f32 %v821, %v828
        %v833 = vadd.f32 %v823, %v829
        %v834 = vmax.f32 %v830, 0.0
        %v835 = vmax.f32 %v831, 0.0
        %v836 = vmax.f32 %v832, 0.0
        %v837 = vmax.f32 %v833, 0.0
        %v838 = vmax.f32 %v780, %v834
        %v839 = vmax.f32 %v781, %v835
        %v840 = vmax.f32 %v782, %v836
        %v841 = vmax.f32 %v783, %v837
        %843 = vset.pattern.permute.xlu0 0
        %844 = vperm.xlu0 %843, %v435
        %v845 = vpop.permute.xlu0 %844
        %848 = vset.pattern.permute.xlu0 0
        %849 = vperm.xlu0 %848, %v436
        %v850 = vpop.permute.xlu0 %849
        %853 = vset.pattern.permute.xlu0 0
        %854 = vperm.xlu0 %853, %v437
        %v855 = vpop.permute.xlu0 %854
        %858 = vset.pattern.permute.xlu0 0
        %859 = vperm.xlu0 %858, %v438
        %v860 = vpop.permute.xlu0 %859
        %v862 = vmul.f32 %v838, %v845
        %v863 = vmul.f32 %v839, %v850
        %v864 = vmul.f32 %v840, %v855
        %v865 = vmul.f32 %v841, %v860
        %v866 = vsel %vm382, %v862, 0.0
        %v867 = vsel %vm382, %v863, 0.0
        %v868 = vadd.f32 %v866, %v867
        %v869 = vsel %vm382, %v864, 0.0
        %v870 = vadd.f32 %v868, %v869
        %v871 = vsel %vm382, %v865, 0.0
        %v872 = vadd.f32 %v870, %v871
        %v873 = vrot.slane %v872, 4
        %v874 = vadd.f32 %v872, %v873
        %v875 = vrot.slane %v874, 2
        %v876 = vadd.f32 %v874, %v875
        %v877 = vrot.slane %v876, 1
        %v878 = vadd.f32 %v876, %v877
        %880 = vset.pattern.permute.xlu0 0
        %881 = vperm.xlu0 %880, %v454
        %v882 = vpop.permute.xlu0 %881
        %v884 = vmul.f32 %v878, %v882
        %v885 = vsub.f32 %v862, %v884
        %v886 = vsub.f32 %v863, %v884
        %v887 = vsub.f32 %v864, %v884
        %v888 = vsub.f32 %v865, %v884
        %v889 = vmul.f32 %v885, %v845
        %v890 = vmul.f32 %v886, %v850
        %v891 = vmul.f32 %v887, %v855
        %v892 = vmul.f32 %v888, %v860
        %v893 = vmul.f32 %v889, %v889
        %v894 = vmul.f32 %v890, %v890
        %v895 = vmul.f32 %v891, %v891
        %v896 = vmul.f32 %v892, %v892
        %v897 = vsel %vm382, %v893, 0.0
        %v898 = vsel %vm382, %v894, 0.0
        %v899 = vadd.f32 %v897, %v898
        %v900 = vsel %vm382, %v895, 0.0
        %v901 = vadd.f32 %v899, %v900
        %v902 = vsel %vm382, %v896, 0.0
        %v903 = vadd.f32 %v901, %v902
        %v904 = vrot.slane %v903, 4
        %v905 = vadd.f32 %v903, %v904
        %v906 = vrot.slane %v905, 2
        %v907 = vadd.f32 %v905, %v906
        %v908 = vrot.slane %v907, 1
        %v909 = vadd.f32 %v907, %v908
        %v910 = vmul.f32 %v909, %v882
        %v911 = vadd.f32 %v910, 1e-05
        %v912 = vrsqrt.pop %v911
        %v913 = vmul.f32 %v912, %v911
        %v914 = vmul.f32 %v913, %v912
        %v915 = vmul.f32 0.5, %v914
        %v916 = vsub.f32 1.5, %v915
        %v917 = vmul.f32 %v912, %v916
        %vm918 = vweird.f32 %v911
        %vm919 = vweird.f32 %v912
        %vm920 = vmor %vm918, %vm919
        %v921 = vsel %vm920, %v912, %v917
        %v922 = vmul.f32 %v889, %v921
        %v923 = vmul.f32 %v890, %v921
        %v924 = vmul.f32 %v891, %v921
        %v925 = vmul.f32 %v892, %v921
        %v926 = vld [vmem:[#allocation2] sm:$0xf]
        %v927 = vld [vmem:[#allocation2 + $0x4] sm:$0xf]
        %v928 = vld [vmem:[#allocation2 + $0x8] sm:$0xf]
        %v929 = vld [vmem:[#allocation2 + $0xc] sm:$0xf]
        %v930 = vld [vmem:[#allocation2 + $0x10] sm:$0xf]
        %v931 = vld [vmem:[#allocation2 + $0x14] sm:$0xf]
        %v932 = vld [vmem:[#allocation2 + $0x18] sm:$0xf]
        %v933 = vld [vmem:[#allocation2 + $0x1c] sm:$0xf]
        %v934 = vld [vmem:[#allocation2 + $0x20] sm:$0xf]
        %v935 = vld [vmem:[#allocation2 + $0x24] sm:$0xf]
        %v936 = vld [vmem:[#allocation2 + $0x28] sm:$0xf]
        %v937 = vld [vmem:[#allocation2 + $0x2c] sm:$0xf]
        %v938 = vld [vmem:[#allocation2 + $0x30] sm:$0xf]
        %v939 = vld [vmem:[#allocation2 + $0x34] sm:$0xf]
        %v940 = vld [vmem:[#allocation2 + $0x38] sm:$0xf]
        %v941 = vld [vmem:[#allocation2 + $0x3c] sm:$0xf]
        %v942 = vld [vmem:[%s6] sm:$0xf]
        %v943 = vpack.c.bf16 %v922, %v922
        %v944 = vpack.c.bf16 %v923, %v923
        %v945 = vpack.c.bf16 %v924, %v924
        %v946 = vpack.c.bf16 %v925, %v925
        %v951 = vunpack.c.l.b16 %v943
        %v952 = vunpack.c.l.b16 %v944
        %v953 = vunpack.c.l.b16 %v945
        %v954 = vunpack.c.l.b16 %v946
        %v955 = vpack.c.b16 %v952, %v951
        %v956 = vpack.c.b16 %v954, %v953
        %959 = vmatpush.bf16.msra.mxu0 0
        %960 = vmatpush.bf16.msra.mxu0 0
        %961 = vmatpush.bf16.msra.mxu0 0
        %962 = vmatpush.bf16.msra.mxu0 0
        %963 = vmatpush.bf16.msra.mxu0 0
        %964 = vmatpush.bf16.msra.mxu0 0
        %965 = vmatpush.bf16.msra.mxu0 %v956
        %966 = vmatpush.bf16.msra.mxu0 %v955
        %967 = vmatmul.bf16.gmra.mxu0 %v525
        %v968 = vpop.f32.mrf.mxu0
        %v969 = vadd.f32 0.0, %v968
        %v970 = vpop.f32.mrf.mxu0
        %v971 = vadd.f32 0.0, %v970
        %972 = vmatmul.bf16.gmra.mxu0 %v528
        %v973 = vpop.f32.mrf.mxu0
        %v974 = vadd.f32 0.0, %v973
        %v975 = vpop.f32.mrf.mxu0
        %v976 = vadd.f32 0.0, %v975
        %977 = vmatmul.bf16.gmra.mxu0 %v531
        %v978 = vpop.f32.mrf.mxu0
        %v979 = vadd.f32 0.0, %v978
        %v980 = vpop.f32.mrf.mxu0
        %v981 = vadd.f32 0.0, %v980
        %982 = vmatmul.bf16.gmra.mxu0 %v534
        %v983 = vpop.f32.mrf.mxu0
        %v984 = vadd.f32 0.0, %v983
        %v985 = vpop.f32.mrf.mxu0
        %v986 = vadd.f32 0.0, %v985
        %987 = vmatmul.bf16.gmra.mxu0 %v537
        %v988 = vpop.f32.mrf.mxu0
        %v989 = vadd.f32 0.0, %v988
        %v990 = vpop.f32.mrf.mxu0
        %v991 = vadd.f32 0.0, %v990
        %992 = vmatmul.bf16.gmra.mxu0 %v540
        %v993 = vpop.f32.mrf.mxu0
        %v994 = vadd.f32 0.0, %v993
        %v995 = vpop.f32.mrf.mxu0
        %v996 = vadd.f32 0.0, %v995
        %997 = vmatmul.bf16.gmra.mxu0 %v543
        %v998 = vpop.f32.mrf.mxu0
        %v999 = vadd.f32 0.0, %v998
        %v1000 = vpop.f32.mrf.mxu0
        %v1001 = vadd.f32 0.0, %v1000
        %1002 = vmatmul.bf16.gmra.mxu0 %v546
        %v1003 = vpop.f32.mrf.mxu0
        %v1004 = vadd.f32 0.0, %v1003
        %v1005 = vpop.f32.mrf.mxu0
        %v1006 = vadd.f32 0.0, %v1005
        %1007 = vdwg.mxu0
        %v1008 = vpack.c.bf16 %v969, %v969
        %v1009 = vpack.c.bf16 %v971, %v971
        %v1010 = vpack.c.bf16 %v974, %v974
        %v1011 = vpack.c.bf16 %v976, %v976
        %v1012 = vpack.c.bf16 %v979, %v979
        %v1013 = vpack.c.bf16 %v981, %v981
        %v1014 = vpack.c.bf16 %v984, %v984
        %v1015 = vpack.c.bf16 %v986, %v986
        %v1016 = vpack.c.bf16 %v989, %v989
        %v1017 = vpack.c.bf16 %v991, %v991
        %v1018 = vpack.c.bf16 %v994, %v994
        %v1019 = vpack.c.bf16 %v996, %v996
        %v1020 = vpack.c.bf16 %v999, %v999
        %v1021 = vpack.c.bf16 %v1001, %v1001
        %v1022 = vpack.c.bf16 %v1004, %v1004
        %v1023 = vpack.c.bf16 %v1006, %v1006
        %v1028 = vunpack.c.l.b16 %v1008
        %v1029 = vunpack.c.l.b16 %v1009
        %v1030 = vunpack.c.l.b16 %v1010
        %v1031 = vunpack.c.l.b16 %v1011
        %v1032 = vpack.c.b16 %v1029, %v1028
        %v1033 = vpack.c.b16 %v1031, %v1030
        %v1038 = vunpack.c.l.b16 %v926
        %v1039 = vunpack.c.l.b16 %v927
        %v1040 = vunpack.c.l.b16 %v928
        %v1041 = vunpack.c.l.b16 %v929
        %v1042 = vpack.c.b16 %v1039, %v1038
        %v1043 = vpack.c.b16 %v1041, %v1040
        %v1047 = vsel %vm382, %v1032, 0
        %v1050 = vsel %vm382, %v1033, 0
        %1052 = vmatpush.bf16.msra.mxu0 0
        %1053 = vmatpush.bf16.msra.mxu0 0
        %1054 = vmatpush.bf16.msra.mxu0 0
        %1055 = vmatpush.bf16.msra.mxu0 0
        %1056 = vmatpush.bf16.msra.mxu0 0
        %1057 = vmatpush.bf16.msra.mxu0 0
        %1058 = vmatpush.bf16.msra.mxu0 %v1043
        %1059 = vmatpush.bf16.msra.mxu0 %v1042
        %1060 = vmatmul.bf16.gmra.mxu0 %v1047
        %v1061 = vpop.f32.mrf.mxu0
        %v1062 = vadd.f32 0.0, %v1061
        %v1063 = vpop.f32.mrf.mxu0
        %v1064 = vadd.f32 0.0, %v1063
        %1065 = vmatmul.bf16.gmra.mxu0 %v1050
        %v1066 = vpop.f32.mrf.mxu0
        %v1067 = vadd.f32 0.0, %v1066
        %v1068 = vpop.f32.mrf.mxu0
        %v1069 = vadd.f32 0.0, %v1068
        %1070 = vdwg.mxu0
        %v1071 = vperm.slane %v942, 0
        %v1072 = vmul.f32 %v385, %v1071
        %v1073 = vmul.f32 %v388, %v1071
        %v1074 = vmul.f32 %v391, %v1071
        %v1075 = vmul.f32 %v394, %v1071
        %v1076 = vadd.f32 %v1062, %v1072
        %v1077 = vadd.f32 %v1064, %v1073
        %v1078 = vadd.f32 %v1067, %v1074
        %v1079 = vadd.f32 %v1069, %v1075
        %v1080 = vmax.f32 %v1076, 0.0
        %v1081 = vmax.f32 %v1077, 0.0
        %v1082 = vmax.f32 %v1078, 0.0
        %v1083 = vmax.f32 %v1079, 0.0
        %v1088 = vunpack.c.l.b16 %v1012
        %v1089 = vunpack.c.l.b16 %v1013
        %v1090 = vunpack.c.l.b16 %v1014
        %v1091 = vunpack.c.l.b16 %v1015
        %v1092 = vpack.c.b16 %v1089, %v1088
        %v1093 = vpack.c.b16 %v1091, %v1090
        %v1098 = vunpack.c.l.b16 %v930
        %v1099 = vunpack.c.l.b16 %v931
        %v1100 = vunpack.c.l.b16 %v932
        %v1101 = vunpack.c.l.b16 %v933
        %v1102 = vpack.c.b16 %v1099, %v1098
        %v1103 = vpack.c.b16 %v1101, %v1100
        %v1107 = vsel %vm382, %v1092, 0
        %v1110 = vsel %vm382, %v1093, 0
        %1112 = vmatpush.bf16.msra.mxu0 0
        %1113 = vmatpush.bf16.msra.mxu0 0
        %1114 = vmatpush.bf16.msra.mxu0 0
        %1115 = vmatpush.bf16.msra.mxu0 0
        %1116 = vmatpush.bf16.msra.mxu0 0
        %1117 = vmatpush.bf16.msra.mxu0 0
        %1118 = vmatpush.bf16.msra.mxu0 %v1103
        %1119 = vmatpush.bf16.msra.mxu0 %v1102
        %1120 = vmatmul.bf16.gmra.mxu0 %v1107
        %v1121 = vpop.f32.mrf.mxu0
        %v1122 = vadd.f32 0.0, %v1121
        %v1123 = vpop.f32.mrf.mxu0
        %v1124 = vadd.f32 0.0, %v1123
        %1125 = vmatmul.bf16.gmra.mxu0 %v1110
        %v1126 = vpop.f32.mrf.mxu0
        %v1127 = vadd.f32 0.0, %v1126
        %v1128 = vpop.f32.mrf.mxu0
        %v1129 = vadd.f32 0.0, %v1128
        %1130 = vdwg.mxu0
        %v1131 = vperm.slane %v942, 1
        %v1132 = vmul.f32 %v397, %v1131
        %v1133 = vmul.f32 %v400, %v1131
        %v1134 = vmul.f32 %v403, %v1131
        %v1135 = vmul.f32 %v406, %v1131
        %v1136 = vadd.f32 %v1122, %v1132
        %v1137 = vadd.f32 %v1124, %v1133
        %v1138 = vadd.f32 %v1127, %v1134
        %v1139 = vadd.f32 %v1129, %v1135
        %v1140 = vmax.f32 %v1136, 0.0
        %v1141 = vmax.f32 %v1137, 0.0
        %v1142 = vmax.f32 %v1138, 0.0
        %v1143 = vmax.f32 %v1139, 0.0
        %v1144 = vmax.f32 %v1080, %v1140
        %v1145 = vmax.f32 %v1081, %v1141
        %v1146 = vmax.f32 %v1082, %v1142
        %v1147 = vmax.f32 %v1083, %v1143
        %v1152 = vunpack.c.l.b16 %v1016
        %v1153 = vunpack.c.l.b16 %v1017
        %v1154 = vunpack.c.l.b16 %v1018
        %v1155 = vunpack.c.l.b16 %v1019
        %v1156 = vpack.c.b16 %v1153, %v1152
        %v1157 = vpack.c.b16 %v1155, %v1154
        %v1162 = vunpack.c.l.b16 %v934
        %v1163 = vunpack.c.l.b16 %v935
        %v1164 = vunpack.c.l.b16 %v936
        %v1165 = vunpack.c.l.b16 %v937
        %v1166 = vpack.c.b16 %v1163, %v1162
        %v1167 = vpack.c.b16 %v1165, %v1164
        %v1171 = vsel %vm382, %v1156, 0
        %v1174 = vsel %vm382, %v1157, 0
        %1176 = vmatpush.bf16.msra.mxu0 0
        %1177 = vmatpush.bf16.msra.mxu0 0
        %1178 = vmatpush.bf16.msra.mxu0 0
        %1179 = vmatpush.bf16.msra.mxu0 0
        %1180 = vmatpush.bf16.msra.mxu0 0
        %1181 = vmatpush.bf16.msra.mxu0 0
        %1182 = vmatpush.bf16.msra.mxu0 %v1167
        %1183 = vmatpush.bf16.msra.mxu0 %v1166
        %1184 = vmatmul.bf16.gmra.mxu0 %v1171
        %v1185 = vpop.f32.mrf.mxu0
        %v1186 = vadd.f32 0.0, %v1185
        %v1187 = vpop.f32.mrf.mxu0
        %v1188 = vadd.f32 0.0, %v1187
        %1189 = vmatmul.bf16.gmra.mxu0 %v1174
        %v1190 = vpop.f32.mrf.mxu0
        %v1191 = vadd.f32 0.0, %v1190
        %v1192 = vpop.f32.mrf.mxu0
        %v1193 = vadd.f32 0.0, %v1192
        %1194 = vdwg.mxu0
        %v1195 = vperm.slane %v942, 2
        %v1196 = vmul.f32 %v409, %v1195
        %v1197 = vmul.f32 %v412, %v1195
        %v1198 = vmul.f32 %v415, %v1195
        %v1199 = vmul.f32 %v418, %v1195
        %v1200 = vadd.f32 %v1186, %v1196
        %v1201 = vadd.f32 %v1188, %v1197
        %v1202 = vadd.f32 %v1191, %v1198
        %v1203 = vadd.f32 %v1193, %v1199
        %v1204 = vmax.f32 %v1200, 0.0
        %v1205 = vmax.f32 %v1201, 0.0
        %v1206 = vmax.f32 %v1202, 0.0
        %v1207 = vmax.f32 %v1203, 0.0
        %v1208 = vmax.f32 %v1144, %v1204
        %v1209 = vmax.f32 %v1145, %v1205
        %v1210 = vmax.f32 %v1146, %v1206
        %v1211 = vmax.f32 %v1147, %v1207
        %v1216 = vunpack.c.l.b16 %v1020
        %v1217 = vunpack.c.l.b16 %v1021
        %v1218 = vunpack.c.l.b16 %v1022
        %v1219 = vunpack.c.l.b16 %v1023
        %v1220 = vpack.c.b16 %v1217, %v1216
        %v1221 = vpack.c.b16 %v1219, %v1218
        %v1226 = vunpack.c.l.b16 %v938
        %v1227 = vunpack.c.l.b16 %v939
        %v1228 = vunpack.c.l.b16 %v940
        %v1229 = vunpack.c.l.b16 %v941
        %v1230 = vpack.c.b16 %v1227, %v1226
        %v1231 = vpack.c.b16 %v1229, %v1228
        %v1235 = vsel %vm382, %v1220, 0
        %v1238 = vsel %vm382, %v1221, 0
        %1240 = vmatpush.bf16.msra.mxu0 0
        %1241 = vmatpush.bf16.msra.mxu0 0
        %1242 = vmatpush.bf16.msra.mxu0 0
        %1243 = vmatpush.bf16.msra.mxu0 0
        %1244 = vmatpush.bf16.msra.mxu0 0
        %1245 = vmatpush.bf16.msra.mxu0 0
        %1246 = vmatpush.bf16.msra.mxu0 %v1231
        %1247 = vmatpush.bf16.msra.mxu0 %v1230
        %1248 = vmatmul.bf16.gmra.mxu0 %v1235
        %v1249 = vpop.f32.mrf.mxu0
        %v1250 = vadd.f32 0.0, %v1249
        %v1251 = vpop.f32.mrf.mxu0
        %v1252 = vadd.f32 0.0, %v1251
        %1253 = vmatmul.bf16.gmra.mxu0 %v1238
        %v1254 = vpop.f32.mrf.mxu0
        %v1255 = vadd.f32 0.0, %v1254
        %v1256 = vpop.f32.mrf.mxu0
        %v1257 = vadd.f32 0.0, %v1256
        %1258 = vdwg.mxu0
        %v1259 = vperm.slane %v942, 3
        %v1260 = vmul.f32 %v421, %v1259
        %v1261 = vmul.f32 %v424, %v1259
        %v1262 = vmul.f32 %v427, %v1259
        %v1263 = vmul.f32 %v430, %v1259
        %v1264 = vadd.f32 %v1250, %v1260
        %v1265 = vadd.f32 %v1252, %v1261
        %v1266 = vadd.f32 %v1255, %v1262
        %v1267 = vadd.f32 %v1257, %v1263
        %v1268 = vmax.f32 %v1264, 0.0
        %v1269 = vmax.f32 %v1265, 0.0
        %v1270 = vmax.f32 %v1266, 0.0
        %v1271 = vmax.f32 %v1267, 0.0
        %v1272 = vmax.f32 %v1208, %v1268
        %v1273 = vmax.f32 %v1209, %v1269
        %v1274 = vmax.f32 %v1210, %v1270
        %v1275 = vmax.f32 %v1211, %v1271
        %v1276 = vmul.f32 %v1272, %v845
        %v1277 = vmul.f32 %v1273, %v850
        %v1278 = vmul.f32 %v1274, %v855
        %v1279 = vmul.f32 %v1275, %v860
        %v1280 = vsel %vm382, %v1276, 0.0
        %v1281 = vsel %vm382, %v1277, 0.0
        %v1282 = vadd.f32 %v1280, %v1281
        %v1283 = vsel %vm382, %v1278, 0.0
        %v1284 = vadd.f32 %v1282, %v1283
        %v1285 = vsel %vm382, %v1279, 0.0
        %v1286 = vadd.f32 %v1284, %v1285
        %v1287 = vrot.slane %v1286, 4
        %v1288 = vadd.f32 %v1286, %v1287
        %v1289 = vrot.slane %v1288, 2
        %v1290 = vadd.f32 %v1288, %v1289
        %v1291 = vrot.slane %v1290, 1
        %v1292 = vadd.f32 %v1290, %v1291
        %v1293 = vmul.f32 %v1292, %v882
        %v1294 = vsub.f32 %v1276, %v1293
        %v1295 = vsub.f32 %v1277, %v1293
        %v1296 = vsub.f32 %v1278, %v1293
        %v1297 = vsub.f32 %v1279, %v1293
        %v1298 = vmul.f32 %v1294, %v845
        %v1299 = vmul.f32 %v1295, %v850
        %v1300 = vmul.f32 %v1296, %v855
        %v1301 = vmul.f32 %v1297, %v860
        %v1302 = vmul.f32 %v1298, %v1298
        %v1303 = vmul.f32 %v1299, %v1299
        %v1304 = vmul.f32 %v1300, %v1300
        %v1305 = vmul.f32 %v1301, %v1301
        %v1306 = vsel %vm382, %v1302, 0.0
        %v1307 = vsel %vm382, %v1303, 0.0
        %v1308 = vadd.f32 %v1306, %v1307
        %v1309 = vsel %vm382, %v1304, 0.0
        %v1310 = vadd.f32 %v1308, %v1309
        %v1311 = vsel %vm382, %v1305, 0.0
        %v1312 = vadd.f32 %v1310, %v1311
        %v1313 = vrot.slane %v1312, 4
        %v1314 = vadd.f32 %v1312, %v1313
        %v1315 = vrot.slane %v1314, 2
        %v1316 = vadd.f32 %v1314, %v1315
        %v1317 = vrot.slane %v1316, 1
        %v1318 = vadd.f32 %v1316, %v1317
        %v1319 = vmul.f32 %v1318, %v882
        %v1320 = vadd.f32 %v1319, 1e-05
        %v1321 = vrsqrt.pop %v1320
        %v1322 = vmul.f32 %v1321, %v1320
        %v1323 = vmul.f32 %v1322, %v1321
        %v1324 = vmul.f32 0.5, %v1323
        %v1325 = vsub.f32 1.5, %v1324
        %v1326 = vmul.f32 %v1321, %v1325
        %vm1327 = vweird.f32 %v1320
        %vm1328 = vweird.f32 %v1321
        %vm1329 = vmor %vm1327, %vm1328
        %v1330 = vsel %vm1329, %v1321, %v1326
        %v1331 = vmul.f32 %v1298, %v1330
        %v1332 = vmul.f32 %v1299, %v1330
        %v1333 = vmul.f32 %v1300, %v1330
        %v1334 = vmul.f32 %v1301, %v1330
        %1335 = vst.msk [vmem:[%s333] sm:$0xff] %vm382, %v1331
        %1336 = vst.msk [vmem:[%s333 + $0x8] sm:$0xff] %vm382, %v1332
        %1337 = vst.msk [vmem:[%s333 + $0x10] sm:$0xff] %vm382, %v1333
        %1338 = vst.msk [vmem:[%s333 + $0x18] sm:$0xff] %vm382, %v1334
        %s1339 = sand.u32 %s193, 1
        %s1340 = scalar_lea.sflag [#allocation4], %s1339
        %s1341 = sand.u32 %s193, 1
        %s1342 = smul.addr %s1341, 32
        %s1343 = scalar_lea.vmem [#allocation7], %s1342
        // Predicated region
        $region57: #{tpu_custom_call.1} parent=47 // pred_check
          %p1344 = pneg %p203
        $region58: #{tpu_custom_call.1} parent=47 // pred_check_branch
          %1346 = sbr.rel (%p1344) target = $region60
        $region59: #{tpu_custom_call.1} parent=47 // pred_region
          %1348 = vsyncadd %s1340, 0
          %s1349 = smul.addr %s23, 4
          %s1350 = smul.addr %s1349, 8
          %s1351 = scalar_lea.hbm %s7, %s1350
          %s1352 = sshll.u32 %s1343, 4
          %s1353 = int_to_ptr.vmem [resolvable:$true] %s1352
          %s1354 = sshll.u32 %s1351, 4
          %s1355 = int_to_ptr.hbm [resolvable:$true] %s1354
          %1360 = dma.vmem_to_hbm [thread:$0]  %s1353, 512, %s1355, %s1340, 128, 128, 8
        $region60: #{tpu_custom_call.1} parent=47 // pred_fallthru
          _
      $region48: #{tpu_custom_call.1} parent=5 // pred_fallthru
        _
      %p1361 = scmp.le.s32.totalorder 2, %s18
      // Predicated region
      $region61: #{tpu_custom_call.1} parent=5 // pred_check
        %p1362 = pneg %p1361
      $region62: #{tpu_custom_call.1} parent=5 // pred_check_branch
        %1364 = sbr.rel (%p1362) target = $region64
      $region63: #{tpu_custom_call.1} parent=5 // pred_region
        %s1365 = ssub.s32 %s18, 2
        // Predicated region
        $region65: #{tpu_custom_call.1} parent=63 // pred_check
          %p1366 = pneg %p209
        $region66: #{tpu_custom_call.1} parent=63 // pred_check_branch
          %1368 = sbr.rel (%p1366) target = $region68
        $region67: #{tpu_custom_call.1} parent=63 // pred_region
          %s1369 = sand.u32 %s194, 1
          %s1370 = scalar_lea.sflag [#allocation4], %s1369
          %s1371 = sand.u32 %s194, 1
          %s1372 = smul.addr %s1371, 32
          %s1373 = scalar_lea.vmem [#allocation7], %s1372
          %1375 = dma.done %s1370, 512
        $region68: #{tpu_custom_call.1} parent=63 // pred_fallthru
          _
      $region64: #{tpu_custom_call.1} parent=5 // pred_fallthru
        _
    $region6: #{tpu_custom_call.1} parent=1 // loop_footer
      %s22 = sadd.s32 1, %s18
    $region7: #{tpu_custom_call.1} parent=1 // loop_footer_branch
      %17 = sbr.rel target = $region3
    $region8: #{tpu_custom_call.1} parent=1 // loop_exit
      _
    %1376 = vsyncpa [#allocation3], 1
    %s1377 = scalar_lea.sflag [#allocation3], 1
    %1378 = vsyncpa %s1377, 1
    %1379 = vsyncpa [#allocation6], 1
    %1380 = vsyncpa [#allocation4], 1
    %s1381 = scalar_lea.sflag [#allocation4], 1
    %1382 = vsyncpa %s1381, 1

</llo_original>
